<compile_context>
chip_gen: v5e
topology: v5e:2x2
jax: 0.10.0
libtpu: 0.0.40
codegen_flags: <defaults>
</compile_context>

<pallas_src>
import math

import jax
import jax.numpy as jnp
from jax import lax
from jax.experimental import pallas as pl
from jax.experimental.pallas import tpu as pltpu

# ---------------- synthetic "KoELECTRA-base-ish" config (small, lane-dense) --
BATCH = 2
SEQ = 8
HIDDEN = 128                      # multiple of 128 -> lane-dense last dim
NUM_HEADS = 4
HEAD_DIM = HIDDEN // NUM_HEADS    # 32
INTERMEDIATE = 4 * HIDDEN         # 512
NUM_LAYERS = 2
VOCAB = 100
MAX_POS = 16
TYPE_VOCAB = 2
NUM_LABELS = 8
NUM_LABELS_PAD = 128              # lane-dense classifier width, sliced in JAX
LN_EPS = 1e-12
_ATTN_SCALE = 1.0 / math.sqrt(HEAD_DIM)
_INV_SQRT2 = 1.0 / math.sqrt(2.0)


# ---------------- in-kernel helpers (all f32 elementwise) ---------------------
def _layernorm(x, g, b, eps=LN_EPS):
    mu = jnp.mean(x, axis=-1, keepdims=True)
    xc = x - mu
    var = jnp.mean(xc * xc, axis=-1, keepdims=True)
    return xc * lax.rsqrt(var + eps) * g + b


def _erf(x):
    # Abramowitz & Stegun 7.1.26 rational approximation, |error| < 1.5e-7
    # (plus the EUP-reciprocal error).  Keeps the lowering to exp/mul/add/rcp.
    a1, a2, a3, a4, a5 = (0.254829592, -0.284496736, 1.421413741,
                          -1.453152027, 1.061405429)
    p = 0.3275911
    ax = jnp.abs(x)
    t = pl.reciprocal(1.0 + p * ax, approx=True)          # EUP, not VALU divide
    poly = t * (a1 + t * (a2 + t * (a3 + t * (a4 + t * a5))))
    y = 1.0 - poly * jnp.exp(-ax * ax)
    return jnp.where(x >= 0.0, y, -y)


def _gelu_exact(x):
    # Exact (erf-based) GELU, matching HF ELECTRA's "gelu" activation.
    return 0.5 * x * (1.0 + _erf(x * _INV_SQRT2))


# ---------------- the fused kernel: one (batch, layer) grid step --------------
def _koelectra_kernel(
    emb_ref,      # (S, H)   f32  word+pos+type embeddings of this sequence
    mask_ref,     # (1, S)   f32  additive key mask (0 keep / -1e9 pad)
    embln_ref,    # (2, H)   f32  [gamma; beta] of embedding LayerNorm
    wqkv_ref,     # (H, 3H)  bf16 fused QKV weights        (streamed per layer)
    bqkv_ref,     # (1, 3H)  f32  fused QKV bias           (streamed per layer)
    wo_ref,       # (H, H)   bf16 attention output proj    (streamed per layer)
    w1_ref,       # (H, I)   bf16 FFN up                   (streamed per layer)
    b1_ref,       # (1, I)   f32                           (streamed per layer)
    w2_ref,       # (I, H)   bf16 FFN down                 (streamed per layer)
    vec_ref,      # (6, H)   f32  [bo, ln1_g, ln1_b, b2, ln2_g, ln2_b]
    clsw_ref,     # (H, NUM_LABELS_PAD) bf16 (zero-padded cols >= NUM_LABELS)
    clsb_ref,     # (1, NUM_LABELS_PAD) f32
    o_ref,        # (1, NUM_LABELS_PAD) f32  CLS logits of this sequence
    x_ref,        # VMEM scratch (S, H) f32: hidden state carried over layers
):
    layer = pl.program_id(1)

    # ---- initialize the carried hidden state at the first layer -------------
    @pl.when(layer == 0)
    def _():
        x_ref[...] = _layernorm(emb_ref[...], embln_ref[0:1, :], embln_ref[1:2, :])

    x = x_ref[...]                                   # (S, H) f32
    mask_add = mask_ref[...]                         # (1, S) f32, bcast over rows
    xb = x.astype(jnp.bfloat16)

    # ---- fused QKV projection: one lane-dense (S,H)@(H,3H) MXU pass ---------
    qkv = (jnp.dot(xb, wqkv_ref[...], preferred_element_type=jnp.float32)
           + bqkv_ref[...])                          # (S, 3H) f32

    # ---- per-head attention, entirely in registers (no scratch round-trip) --
    ctx_parts = []
    for h in range(NUM_HEADS):
        lo = h * HEAD_DIM
        qh = qkv[:, lo:lo + HEAD_DIM].astype(jnp.bfloat16)                    # (S, HD)
        kh = qkv[:, HIDDEN + lo:HIDDEN + lo + HEAD_DIM].astype(jnp.bfloat16)  # (S, HD)
        vh = qkv[:, 2 * HIDDEN + lo:2 * HIDDEN + lo + HEAD_DIM].astype(jnp.bfloat16)

        # scores = q @ k^T without materializing the transpose
        s = lax.dot_general(qh, kh, (((1,), (1,)), ((), ())),
                            preferred_element_type=jnp.float32)               # (S, S)
        s = s * _ATTN_SCALE + mask_add
        s = s - jnp.max(s, axis=-1, keepdims=True)
        p = jnp.exp(s)
        p = p * pl.reciprocal(jnp.sum(p, axis=-1, keepdims=True), approx=True)
        ctx_parts.append(jnp.dot(p.astype(jnp.bfloat16), vh,
                                 preferred_element_type=jnp.float32))         # (S, HD)

    # re-pack lane-dense and do ONE K=128 output-projection contraction
    ctx = jnp.concatenate(ctx_parts, axis=-1)        # (S, H) f32
    vec = vec_ref[...]                               # (6, H) f32
    attn_out = (jnp.dot(ctx.astype(jnp.bfloat16), wo_ref[...],
                        preferred_element_type=jnp.float32) + vec[0:1, :])
    h1 = _layernorm(x + attn_out, vec[1:2, :], vec[2:3, :])

    # ---- FFN -----------------------------------------------------------------
    ffn = _gelu_exact(
        jnp.dot(h1.astype(jnp.bfloat16), w1_ref[...],
                preferred_element_type=jnp.float32) + b1_ref[...])
    ffn_out = (jnp.dot(ffn.astype(jnp.bfloat16), w2_ref[...],
                       preferred_element_type=jnp.float32) + vec[3:4, :])
    x_new = _layernorm(h1 + ffn_out, vec[4:5, :], vec[5:6, :])
    x_ref[...] = x_new

    # ---- classifier epilogue: CLS row only, lane-dense (1, 128) store -------
    @pl.when(layer == pl.num_programs(1) - 1)
    def _():
        cls = x_new[0:1, :].astype(jnp.bfloat16)     # (1, H)
        o_ref[...] = (jnp.dot(cls, clsw_ref[...],
                              preferred_element_type=jnp.float32)
                      + clsb_ref[...])


def _fused_forward(emb, mask_add, params):
    """emb: (B, S, H) f32, mask_add: (B, 1, S) f32 -> (B, 1, NUM_LABELS_PAD)."""
    B = emb.shape[0]

    in_specs = [
        # per-sequence activations / mask (change with b only)
        pl.BlockSpec((None, SEQ, HIDDEN), lambda b, l: (b, 0, 0)),          # emb
        pl.BlockSpec((None, 1, SEQ), lambda b, l: (b, 0, 0)),               # mask row
        # embedding LayerNorm params (constant)
        pl.BlockSpec((2, HIDDEN), lambda b, l: (0, 0)),                     # emb_ln
        # per-layer weights, streamed along the "arbitrary" layer axis
        pl.BlockSpec((None, HIDDEN, 3 * HIDDEN), lambda b, l: (l, 0, 0)),   # wqkv
        pl.BlockSpec((None, 1, 3 * HIDDEN), lambda b, l: (l, 0, 0)),        # bqkv
        pl.BlockSpec((None, HIDDEN, HIDDEN), lambda b, l: (l, 0, 0)),       # wo
        pl.BlockSpec((None, HIDDEN, INTERMEDIATE), lambda b, l: (l, 0, 0)), # w1
        pl.BlockSpec((None, 1, INTERMEDIATE), lambda b, l: (l, 0, 0)),      # b1
        pl.BlockSpec((None, INTERMEDIATE, HIDDEN), lambda b, l: (l, 0, 0)), # w2
        pl.BlockSpec((None, 6, HIDDEN), lambda b, l: (l, 0, 0)),            # vec
        # classifier (constant)
        pl.BlockSpec((HIDDEN, NUM_LABELS_PAD), lambda b, l: (0, 0)),        # cls_w
        pl.BlockSpec((1, NUM_LABELS_PAD), lambda b, l: (0, 0)),             # cls_b
    ]
    out_spec = pl.BlockSpec((None, 1, NUM_LABELS_PAD), lambda b, l: (b, 0, 0))

    return pl.pallas_call(
        _koelectra_kernel,
        out_shape=jax.ShapeDtypeStruct((B, 1, NUM_LABELS_PAD), jnp.float32),
        grid_spec=pltpu.PrefetchScalarGridSpec(
            num_scalar_prefetch=0,
            grid=(B, NUM_LAYERS),
            in_specs=in_specs,
            out_specs=out_spec,
            scratch_shapes=[pltpu.VMEM((SEQ, HIDDEN), jnp.float32)],  # carried x
        ),
        compiler_params=pltpu.CompilerParams(
            dimension_semantics=("parallel", "arbitrary"),
            vmem_limit_bytes=32 * 1024 * 1024,
        ),
    )(
        emb, mask_add, params["emb_ln"],
        params["wqkv"], params["bqkv"], params["wo"],
        params["w1"], params["b1"], params["w2"], params["vec_h"],
        params["cls_w"], params["cls_b"],
    )


# ---------------- parameter init + packing (deterministic, synthetic) ---------
def init_params(key):
    def nrm(k, shape, std=0.02):
        return jax.random.normal(k, shape, jnp.float32) * std

    keys = jax.random.split(key, 4 + NUM_LAYERS)
    params = {
        "word_emb": nrm(keys[0], (VOCAB, HIDDEN)),
        "pos_emb": nrm(keys[1], (MAX_POS, HIDDEN)),
        "type_emb": nrm(keys[2], (TYPE_VOCAB, HIDDEN)),
        "emb_ln": jnp.concatenate(
            [jnp.ones((1, HIDDEN), jnp.float32),
             jnp.zeros((1, HIDDEN), jnp.float32)], axis=0),
    }
    # classifier, zero-padded to a lane-dense width
    cls_w = jnp.zeros((HIDDEN, NUM_LABELS_PAD), jnp.float32)
    cls_w = cls_w.at[:, :NUM_LABELS].set(nrm(keys[3], (HIDDEN, NUM_LABELS)))
    params["cls_w"] = cls_w.astype(jnp.bfloat16)
    params["cls_b"] = jnp.zeros((1, NUM_LABELS_PAD), jnp.float32)

    wqkv, bqkv, wo, w1, b1, w2, vecs = [], [], [], [], [], [], []
    for li in range(NUM_LAYERS):
        lk = jax.random.split(keys[4 + li], 6)
        wq = nrm(lk[0], (HIDDEN, HIDDEN))
        wk = nrm(lk[1], (HIDDEN, HIDDEN))
        wv = nrm(lk[2], (HIDDEN, HIDDEN))
        wqkv.append(jnp.concatenate([wq, wk, wv], axis=1))         # (H, 3H)
        bqkv.append(jnp.zeros((1, 3 * HIDDEN), jnp.float32))
        wo.append(nrm(lk[3], (HIDDEN, HIDDEN)))                    # (H, H) lane-dense
        w1.append(nrm(lk[4], (HIDDEN, INTERMEDIATE)))
        b1.append(jnp.zeros((1, INTERMEDIATE), jnp.float32))
        w2.append(nrm(lk[5], (INTERMEDIATE, HIDDEN)))
        vecs.append(jnp.stack([
            jnp.zeros((HIDDEN,), jnp.float32),   # bo
            jnp.ones((HIDDEN,), jnp.float32),    # ln1_g
            jnp.zeros((HIDDEN,), jnp.float32),   # ln1_b
            jnp.zeros((HIDDEN,), jnp.float32),   # b2
            jnp.ones((HIDDEN,), jnp.float32),    # ln2_g
            jnp.zeros((HIDDEN,), jnp.float32),   # ln2_b
        ], axis=0))                                                # (6, H)

    params["wqkv"] = jnp.stack(wqkv).astype(jnp.bfloat16)          # (L, H, 3H)
    params["bqkv"] = jnp.stack(bqkv)                               # (L, 1, 3H)
    params["wo"] = jnp.stack(wo).astype(jnp.bfloat16)              # (L, H, H)
    params["w1"] = jnp.stack(w1).astype(jnp.bfloat16)              # (L, H, I)
    params["b1"] = jnp.stack(b1)                                   # (L, 1, I)
    params["w2"] = jnp.stack(w2).astype(jnp.bfloat16)              # (L, I, H)
    params["vec_h"] = jnp.stack(vecs)                              # (L, 6, H)
    return params


# ---------------- full forward (KOELECTRAMultiLabel.forward) ------------------
@jax.jit
def koelectra_multilabel_forward(params, input_ids, attention_mask):
    B, S = input_ids.shape
    # --- embeddings (data-dependent gather = JAX glue) ---
    # TODO(synk): embedding row gathers stay in JAX (data-dependent lookup).
    we = jnp.take(params["word_emb"], input_ids, axis=0)           # (B, S, H)
    pe = params["pos_emb"][:S][None, :, :]                         # (1, S, H)
    te = params["type_emb"][0][None, None, :]                      # token_type_ids = 0
    emb = (we + pe + te).astype(jnp.float32)                       # (B, S, H)

    # --- tiny per-sequence additive key mask (0 keep / -1e9 pad): (B, 1, S) ---
    mask_add = jnp.where(attention_mask[:, None, :] > 0, 0.0, -1e9).astype(jnp.float32)

    # --- encoder + classifier in ONE Pallas kernel, grid = (batch, layer) ---
    logits = _fused_forward(emb, mask_add, params)                 # (B, 1, 128)

    return logits[:, 0, :NUM_LABELS]                               # (B, NUM_LABELS)


if __name__ == "__main__":
    key = jax.random.PRNGKey(0)
    pkey, dkey = jax.random.split(key)
    params = init_params(pkey)

    input_ids = jax.random.randint(dkey, (BATCH, SEQ), 0, VOCAB, dtype=jnp.int32)
    attention_mask = jnp.array(
        [[1] * SEQ, [1] * (SEQ - 3) + [0] * 3], dtype=jnp.int32)   # second seq padded

    logits = koelectra_multilabel_forward(params, input_ids, attention_mask)
    logits = jax.block_until_ready(logits)
    assert logits.shape == (BATCH, NUM_LABELS)
    assert bool(jnp.all(jnp.isfinite(logits)))
    print("KERNEL_OK")
</pallas_src>

<mosaic_0001>
module attributes {stable_mosaic.version = 11 : i64} {
  func.func @_koelectra_kernel(%arg0: i32, %arg1: i32, %arg2: memref<1x8x128xf32, #tpu.memory_space<vmem>>, %arg3: memref<1x1x8xf32, #tpu.memory_space<vmem>>, %arg4: memref<2x128xf32, #tpu.memory_space<vmem>>, %arg5: memref<1x128x384xbf16, #tpu.memory_space<vmem>>, %arg6: memref<1x1x384xf32, #tpu.memory_space<vmem>>, %arg7: memref<1x128x128xbf16, #tpu.memory_space<vmem>>, %arg8: memref<1x128x512xbf16, #tpu.memory_space<vmem>>, %arg9: memref<1x1x512xf32, #tpu.memory_space<vmem>>, %arg10: memref<1x512x128xbf16, #tpu.memory_space<vmem>>, %arg11: memref<1x6x128xf32, #tpu.memory_space<vmem>>, %arg12: memref<128x128xbf16, #tpu.memory_space<vmem>>, %arg13: memref<1x128xf32, #tpu.memory_space<vmem>>, %arg14: memref<1x1x128xf32, #tpu.memory_space<vmem>>, %arg15: memref<8x128xf32, #tpu.memory_space<vmem>>) attributes {dimension_semantics = [#tpu.dimension_semantics<parallel>, #tpu.dimension_semantics<arbitrary>], iteration_bounds = array<i64: 2, 2>, scalar_prefetch = 0 : i64, scratch_operands = 1 : i64, tpu.core_type = #tpu.core_type<tc>, window_params = [{transform_indices = @transform_0, window_bounds = array<i64: 1, 8, 128>}, {transform_indices = @transform_1, window_bounds = array<i64: 1, 1, 8>}, {pipeline_mode = #tpu.pipeline_mode<synchronous>, transform_indices = @transform_2, window_bounds = array<i64: 2, 128>}, {transform_indices = @transform_3, window_bounds = array<i64: 1, 128, 384>}, {transform_indices = @transform_4, window_bounds = array<i64: 1, 1, 384>}, {transform_indices = @transform_5, window_bounds = array<i64: 1, 128, 128>}, {transform_indices = @transform_6, window_bounds = array<i64: 1, 128, 512>}, {transform_indices = @transform_7, window_bounds = array<i64: 1, 1, 512>}, {transform_indices = @transform_8, window_bounds = array<i64: 1, 512, 128>}, {transform_indices = @transform_9, window_bounds = array<i64: 1, 6, 128>}, {pipeline_mode = #tpu.pipeline_mode<synchronous>, transform_indices = @transform_10, window_bounds = array<i64: 128, 128>}, {pipeline_mode = #tpu.pipeline_mode<synchronous>, transform_indices = @transform_11, window_bounds = array<i64: 1, 128>}, {transform_indices = @transform_12, window_bounds = array<i64: 1, 1, 128>}]} {
    %c0_i32 = arith.constant 0 : i32
    %0 = arith.cmpi eq, %arg1, %c0_i32 : i32
    %1 = arith.extui %0 : i1 to i32
    %c0_i32_0 = arith.constant 0 : i32
    %2 = arith.cmpi ne, %1, %c0_i32_0 : i32
    scf.if %2 {
      %c0_76 = arith.constant 0 : index
      %c0_77 = arith.constant 0 : index
      %c0_78 = arith.constant 0 : index
      %220 = vector.load %arg2[%c0_76, %c0_77, %c0_78] : memref<1x8x128xf32, #tpu.memory_space<vmem>>, vector<1x8x128xf32>
      %221 = vector.shape_cast %220 : vector<1x8x128xf32> to vector<8x128xf32>
      %c0_79 = arith.constant 0 : index
      %c0_80 = arith.constant 0 : index
      %222 = vector.load %arg4[%c0_79, %c0_80] : memref<2x128xf32, #tpu.memory_space<vmem>>, vector<1x128xf32>
      %c1 = arith.constant 1 : index
      %c0_81 = arith.constant 0 : index
      %223 = vector.load %arg4[%c1, %c0_81] : memref<2x128xf32, #tpu.memory_space<vmem>>, vector<1x128xf32>
      %cst_82 = arith.constant dense<0.000000e+00> : vector<8xf32>
      %224 = vector.multi_reduction <add>, %221, %cst_82 [1] : vector<8x128xf32> to vector<8xf32>
      %225 = vector.shape_cast %224 : vector<8xf32> to vector<8x1xf32>
      %cst_83 = arith.constant 1.280000e+02 : f32
      %226 = vector.broadcast %cst_83 : f32 to vector<8x1xf32>
      %227 = arith.divf %225, %226 : vector<8x1xf32>
      %228 = vector.broadcast %227 : vector<8x1xf32> to vector<8x128xf32>
      %229 = arith.subf %221, %228 : vector<8x128xf32>
      %230 = arith.mulf %229, %229 : vector<8x128xf32>
      %cst_84 = arith.constant dense<0.000000e+00> : vector<8xf32>
      %231 = vector.multi_reduction <add>, %230, %cst_84 [1] : vector<8x128xf32> to vector<8xf32>
      %232 = vector.shape_cast %231 : vector<8xf32> to vector<8x1xf32>
      %cst_85 = arith.constant 1.280000e+02 : f32
      %233 = vector.broadcast %cst_85 : f32 to vector<8x1xf32>
      %234 = arith.divf %232, %233 : vector<8x1xf32>
      %cst_86 = arith.constant 9.99999996E-13 : f32
      %235 = vector.broadcast %cst_86 : f32 to vector<8x1xf32>
      %236 = arith.addf %234, %235 : vector<8x1xf32>
      %237 = math.rsqrt %236 : vector<8x1xf32>
      %238 = vector.broadcast %237 : vector<8x1xf32> to vector<8x128xf32>
      %239 = arith.mulf %229, %238 : vector<8x128xf32>
      %240 = vector.broadcast %222 : vector<1x128xf32> to vector<8x128xf32>
      %241 = arith.mulf %239, %240 : vector<8x128xf32>
      %242 = vector.broadcast %223 : vector<1x128xf32> to vector<8x128xf32>
      %243 = arith.addf %241, %242 : vector<8x128xf32>
      %c0_87 = arith.constant 0 : index
      %c0_88 = arith.constant 0 : index
      %244 = vector.load %arg15[%c0_87, %c0_88] : memref<8x128xf32, #tpu.memory_space<vmem>>, vector<8x128xf32>
      tpu.vector_store %arg15[%c0_87, %c0_88], %243 {strides = array<i32>} : memref<8x128xf32, #tpu.memory_space<vmem>>, vector<8x128xf32>,
    } else {
    }
    %c0 = arith.constant 0 : index
    %c0_1 = arith.constant 0 : index
    %3 = vector.load %arg15[%c0, %c0_1] : memref<8x128xf32, #tpu.memory_space<vmem>>, vector<8x128xf32>
    %c0_2 = arith.constant 0 : index
    %c0_3 = arith.constant 0 : index
    %c0_4 = arith.constant 0 : index
    %4 = vector.load %arg3[%c0_2, %c0_3, %c0_4] : memref<1x1x8xf32, #tpu.memory_space<vmem>>, vector<1x1x8xf32>
    %5 = vector.shape_cast %4 : vector<1x1x8xf32> to vector<1x8xf32>
    %6 = arith.truncf %3 : vector<8x128xf32> to vector<8x128xbf16>
    %c0_5 = arith.constant 0 : index
    %c0_6 = arith.constant 0 : index
    %c0_7 = arith.constant 0 : index
    %7 = vector.load %arg5[%c0_5, %c0_6, %c0_7] : memref<1x128x384xbf16, #tpu.memory_space<vmem>>, vector<1x128x384xbf16>
    %8 = vector.shape_cast %7 : vector<1x128x384xbf16> to vector<128x384xbf16>
    %cst = arith.constant dense<0.000000e+00> : vector<8x384xf32>
    %9 = tpu.matmul %6, %8, %cst {dimension_numbers = #tpu.dot_dimension_numbers<[1], [0], [0], [1], [0, 0, 1, 1], [], []>} : vector<8x128xbf16>, vector<128x384xbf16>, vector<8x384xf32> -> vector<8x384xf32>
    %c0_8 = arith.constant 0 : index
    %c0_9 = arith.constant 0 : index
    %c0_10 = arith.constant 0 : index
    %10 = vector.load %arg6[%c0_8, %c0_9, %c0_10] : memref<1x1x384xf32, #tpu.memory_space<vmem>>, vector<1x1x384xf32>
    %11 = vector.shape_cast %10 : vector<1x1x384xf32> to vector<1x384xf32>
    %12 = vector.broadcast %11 : vector<1x384xf32> to vector<8x384xf32>
    %13 = arith.addf %9, %12 : vector<8x384xf32>
    %14 = vector.extract_strided_slice %13 {offsets = [0, 0], sizes = [8, 32], strides = [1, 1]} : vector<8x384xf32> to vector<8x32xf32>
    %15 = arith.truncf %14 : vector<8x32xf32> to vector<8x32xbf16>
    %16 = vector.extract_strided_slice %13 {offsets = [0, 128], sizes = [8, 32], strides = [1, 1]} : vector<8x384xf32> to vector<8x32xf32>
    %17 = arith.truncf %16 : vector<8x32xf32> to vector<8x32xbf16>
    %18 = vector.extract_strided_slice %13 {offsets = [0, 256], sizes = [8, 32], strides = [1, 1]} : vector<8x384xf32> to vector<8x32xf32>
    %19 = arith.truncf %18 : vector<8x32xf32> to vector<8x32xbf16>
    %cst_11 = arith.constant dense<0.000000e+00> : vector<8x8xf32>
    %20 = tpu.matmul %15, %17, %cst_11 {dimension_numbers = #tpu.dot_dimension_numbers<[1], [1], [0], [0], [0, 0, 1, 0], [], []>} : vector<8x32xbf16>, vector<8x32xbf16>, vector<8x8xf32> -> vector<8x8xf32>
    %cst_12 = arith.constant 0.176776692 : f32
    %21 = vector.broadcast %cst_12 : f32 to vector<8x8xf32>
    %22 = arith.mulf %20, %21 : vector<8x8xf32>
    %23 = vector.broadcast %5 : vector<1x8xf32> to vector<8x8xf32>
    %24 = arith.addf %22, %23 : vector<8x8xf32>
    %cst_13 = arith.constant dense<0xFF800000> : vector<8xf32>
    %25 = vector.multi_reduction <maximumf>, %24, %cst_13 [1] : vector<8x8xf32> to vector<8xf32>
    %26 = vector.shape_cast %25 : vector<8xf32> to vector<8x1xf32>
    %27 = vector.broadcast %26 : vector<8x1xf32> to vector<8x8xf32>
    %28 = arith.subf %24, %27 : vector<8x8xf32>
    %29 = math.exp %28 : vector<8x8xf32>
    %cst_14 = arith.constant dense<0.000000e+00> : vector<8xf32>
    %30 = vector.multi_reduction <add>, %29, %cst_14 [1] : vector<8x8xf32> to vector<8xf32>
    %31 = vector.shape_cast %30 : vector<8xf32> to vector<8x1xf32>
    %32 = tpu.reciprocal %31 {approx = true} : vector<8x1xf32> -> vector<8x1xf32>
    %33 = vector.broadcast %32 : vector<8x1xf32> to vector<8x8xf32>
    %34 = arith.mulf %29, %33 : vector<8x8xf32>
    %35 = arith.truncf %34 : vector<8x8xf32> to vector<8x8xbf16>
    %cst_15 = arith.constant dense<0.000000e+00> : vector<8x32xf32>
    %36 = tpu.matmul %35, %19, %cst_15 {dimension_numbers = #tpu.dot_dimension_numbers<[1], [0], [0], [1], [0, 0, 1, 1], [], []>} : vector<8x8xbf16>, vector<8x32xbf16>, vector<8x32xf32> -> vector<8x32xf32>
    %37 = vector.extract_strided_slice %13 {offsets = [0, 32], sizes = [8, 32], strides = [1, 1]} : vector<8x384xf32> to vector<8x32xf32>
    %38 = arith.truncf %37 : vector<8x32xf32> to vector<8x32xbf16>
    %39 = vector.extract_strided_slice %13 {offsets = [0, 160], sizes = [8, 32], strides = [1, 1]} : vector<8x384xf32> to vector<8x32xf32>
    %40 = arith.truncf %39 : vector<8x32xf32> to vector<8x32xbf16>
    %41 = vector.extract_strided_slice %13 {offsets = [0, 288], sizes = [8, 32], strides = [1, 1]} : vector<8x384xf32> to vector<8x32xf32>
    %42 = arith.truncf %41 : vector<8x32xf32> to vector<8x32xbf16>
    %cst_16 = arith.constant dense<0.000000e+00> : vector<8x8xf32>
    %43 = tpu.matmul %38, %40, %cst_16 {dimension_numbers = #tpu.dot_dimension_numbers<[1], [1], [0], [0], [0, 0, 1, 0], [], []>} : vector<8x32xbf16>, vector<8x32xbf16>, vector<8x8xf32> -> vector<8x8xf32>
    %cst_17 = arith.constant 0.176776692 : f32
    %44 = vector.broadcast %cst_17 : f32 to vector<8x8xf32>
    %45 = arith.mulf %43, %44 : vector<8x8xf32>
    %46 = vector.broadcast %5 : vector<1x8xf32> to vector<8x8xf32>
    %47 = arith.addf %45, %46 : vector<8x8xf32>
    %cst_18 = arith.constant dense<0xFF800000> : vector<8xf32>
    %48 = vector.multi_reduction <maximumf>, %47, %cst_18 [1] : vector<8x8xf32> to vector<8xf32>
    %49 = vector.shape_cast %48 : vector<8xf32> to vector<8x1xf32>
    %50 = vector.broadcast %49 : vector<8x1xf32> to vector<8x8xf32>
    %51 = arith.subf %47, %50 : vector<8x8xf32>
    %52 = math.exp %51 : vector<8x8xf32>
    %cst_19 = arith.constant dense<0.000000e+00> : vector<8xf32>
    %53 = vector.multi_reduction <add>, %52, %cst_19 [1] : vector<8x8xf32> to vector<8xf32>
    %54 = vector.shape_cast %53 : vector<8xf32> to vector<8x1xf32>
    %55 = tpu.reciprocal %54 {approx = true} : vector<8x1xf32> -> vector<8x1xf32>
    %56 = vector.broadcast %55 : vector<8x1xf32> to vector<8x8xf32>
    %57 = arith.mulf %52, %56 : vector<8x8xf32>
    %58 = arith.truncf %57 : vector<8x8xf32> to vector<8x8xbf16>
    %cst_20 = arith.constant dense<0.000000e+00> : vector<8x32xf32>
    %59 = tpu.matmul %58, %42, %cst_20 {dimension_numbers = #tpu.dot_dimension_numbers<[1], [0], [0], [1], [0, 0, 1, 1], [], []>} : vector<8x8xbf16>, vector<8x32xbf16>, vector<8x32xf32> -> vector<8x32xf32>
    %60 = vector.extract_strided_slice %13 {offsets = [0, 64], sizes = [8, 32], strides = [1, 1]} : vector<8x384xf32> to vector<8x32xf32>
    %61 = arith.truncf %60 : vector<8x32xf32> to vector<8x32xbf16>
    %62 = vector.extract_strided_slice %13 {offsets = [0, 192], sizes = [8, 32], strides = [1, 1]} : vector<8x384xf32> to vector<8x32xf32>
    %63 = arith.truncf %62 : vector<8x32xf32> to vector<8x32xbf16>
    %64 = vector.extract_strided_slice %13 {offsets = [0, 320], sizes = [8, 32], strides = [1, 1]} : vector<8x384xf32> to vector<8x32xf32>
    %65 = arith.truncf %64 : vector<8x32xf32> to vector<8x32xbf16>
    %cst_21 = arith.constant dense<0.000000e+00> : vector<8x8xf32>
    %66 = tpu.matmul %61, %63, %cst_21 {dimension_numbers = #tpu.dot_dimension_numbers<[1], [1], [0], [0], [0, 0, 1, 0], [], []>} : vector<8x32xbf16>, vector<8x32xbf16>, vector<8x8xf32> -> vector<8x8xf32>
    %cst_22 = arith.constant 0.176776692 : f32
    %67 = vector.broadcast %cst_22 : f32 to vector<8x8xf32>
    %68 = arith.mulf %66, %67 : vector<8x8xf32>
    %69 = vector.broadcast %5 : vector<1x8xf32> to vector<8x8xf32>
    %70 = arith.addf %68, %69 : vector<8x8xf32>
    %cst_23 = arith.constant dense<0xFF800000> : vector<8xf32>
    %71 = vector.multi_reduction <maximumf>, %70, %cst_23 [1] : vector<8x8xf32> to vector<8xf32>
    %72 = vector.shape_cast %71 : vector<8xf32> to vector<8x1xf32>
    %73 = vector.broadcast %72 : vector<8x1xf32> to vector<8x8xf32>
    %74 = arith.subf %70, %73 : vector<8x8xf32>
    %75 = math.exp %74 : vector<8x8xf32>
    %cst_24 = arith.constant dense<0.000000e+00> : vector<8xf32>
    %76 = vector.multi_reduction <add>, %75, %cst_24 [1] : vector<8x8xf32> to vector<8xf32>
    %77 = vector.shape_cast %76 : vector<8xf32> to vector<8x1xf32>
    %78 = tpu.reciprocal %77 {approx = true} : vector<8x1xf32> -> vector<8x1xf32>
    %79 = vector.broadcast %78 : vector<8x1xf32> to vector<8x8xf32>
    %80 = arith.mulf %75, %79 : vector<8x8xf32>
    %81 = arith.truncf %80 : vector<8x8xf32> to vector<8x8xbf16>
    %cst_25 = arith.constant dense<0.000000e+00> : vector<8x32xf32>
    %82 = tpu.matmul %81, %65, %cst_25 {dimension_numbers = #tpu.dot_dimension_numbers<[1], [0], [0], [1], [0, 0, 1, 1], [], []>} : vector<8x8xbf16>, vector<8x32xbf16>, vector<8x32xf32> -> vector<8x32xf32>
    %83 = vector.extract_strided_slice %13 {offsets = [0, 96], sizes = [8, 32], strides = [1, 1]} : vector<8x384xf32> to vector<8x32xf32>
    %84 = arith.truncf %83 : vector<8x32xf32> to vector<8x32xbf16>
    %85 = vector.extract_strided_slice %13 {offsets = [0, 224], sizes = [8, 32], strides = [1, 1]} : vector<8x384xf32> to vector<8x32xf32>
    %86 = arith.truncf %85 : vector<8x32xf32> to vector<8x32xbf16>
    %87 = vector.extract_strided_slice %13 {offsets = [0, 352], sizes = [8, 32], strides = [1, 1]} : vector<8x384xf32> to vector<8x32xf32>
    %88 = arith.truncf %87 : vector<8x32xf32> to vector<8x32xbf16>
    %cst_26 = arith.constant dense<0.000000e+00> : vector<8x8xf32>
    %89 = tpu.matmul %84, %86, %cst_26 {dimension_numbers = #tpu.dot_dimension_numbers<[1], [1], [0], [0], [0, 0, 1, 0], [], []>} : vector<8x32xbf16>, vector<8x32xbf16>, vector<8x8xf32> -> vector<8x8xf32>
    %cst_27 = arith.constant 0.176776692 : f32
    %90 = vector.broadcast %cst_27 : f32 to vector<8x8xf32>
    %91 = arith.mulf %89, %90 : vector<8x8xf32>
    %92 = vector.broadcast %5 : vector<1x8xf32> to vector<8x8xf32>
    %93 = arith.addf %91, %92 : vector<8x8xf32>
    %cst_28 = arith.constant dense<0xFF800000> : vector<8xf32>
    %94 = vector.multi_reduction <maximumf>, %93, %cst_28 [1] : vector<8x8xf32> to vector<8xf32>
    %95 = vector.shape_cast %94 : vector<8xf32> to vector<8x1xf32>
    %96 = vector.broadcast %95 : vector<8x1xf32> to vector<8x8xf32>
    %97 = arith.subf %93, %96 : vector<8x8xf32>
    %98 = math.exp %97 : vector<8x8xf32>
    %cst_29 = arith.constant dense<0.000000e+00> : vector<8xf32>
    %99 = vector.multi_reduction <add>, %98, %cst_29 [1] : vector<8x8xf32> to vector<8xf32>
    %100 = vector.shape_cast %99 : vector<8xf32> to vector<8x1xf32>
    %101 = tpu.reciprocal %100 {approx = true} : vector<8x1xf32> -> vector<8x1xf32>
    %102 = vector.broadcast %101 : vector<8x1xf32> to vector<8x8xf32>
    %103 = arith.mulf %98, %102 : vector<8x8xf32>
    %104 = arith.truncf %103 : vector<8x8xf32> to vector<8x8xbf16>
    %cst_30 = arith.constant dense<0.000000e+00> : vector<8x32xf32>
    %105 = tpu.matmul %104, %88, %cst_30 {dimension_numbers = #tpu.dot_dimension_numbers<[1], [0], [0], [1], [0, 0, 1, 1], [], []>} : vector<8x8xbf16>, vector<8x32xbf16>, vector<8x32xf32> -> vector<8x32xf32>
    %106 = tpu.concatenate %36, %59, %82, %105 in 1 : vector<8x32xf32>, vector<8x32xf32>, vector<8x32xf32>, vector<8x32xf32> -> vector<8x128xf32>
    %c0_31 = arith.constant 0 : index
    %c0_32 = arith.constant 0 : index
    %c0_33 = arith.constant 0 : index
    %107 = vector.load %arg11[%c0_31, %c0_32, %c0_33] : memref<1x6x128xf32, #tpu.memory_space<vmem>>, vector<1x6x128xf32>
    %108 = vector.shape_cast %107 : vector<1x6x128xf32> to vector<6x128xf32>
    %109 = arith.truncf %106 : vector<8x128xf32> to vector<8x128xbf16>
    %c0_34 = arith.constant 0 : index
    %c0_35 = arith.constant 0 : index
    %c0_36 = arith.constant 0 : index
    %110 = vector.load %arg7[%c0_34, %c0_35, %c0_36] : memref<1x128x128xbf16, #tpu.memory_space<vmem>>, vector<1x128x128xbf16>
    %111 = vector.shape_cast %110 : vector<1x128x128xbf16> to vector<128x128xbf16>
    %cst_37 = arith.constant dense<0.000000e+00> : vector<8x128xf32>
    %112 = tpu.matmul %109, %111, %cst_37 {dimension_numbers = #tpu.dot_dimension_numbers<[1], [0], [0], [1], [0, 0, 1, 1], [], []>} : vector<8x128xbf16>, vector<128x128xbf16>, vector<8x128xf32> -> vector<8x128xf32>
    %113 = vector.extract_strided_slice %108 {offsets = [0, 0], sizes = [1, 128], strides = [1, 1]} : vector<6x128xf32> to vector<1x128xf32>
    %114 = vector.broadcast %113 : vector<1x128xf32> to vector<8x128xf32>
    %115 = arith.addf %112, %114 : vector<8x128xf32>
    %116 = arith.addf %3, %115 : vector<8x128xf32>
    %117 = vector.extract_strided_slice %108 {offsets = [1, 0], sizes = [1, 128], strides = [1, 1]} : vector<6x128xf32> to vector<1x128xf32>
    %118 = vector.extract_strided_slice %108 {offsets = [2, 0], sizes = [1, 128], strides = [1, 1]} : vector<6x128xf32> to vector<1x128xf32>
    %cst_38 = arith.constant dense<0.000000e+00> : vector<8xf32>
    %119 = vector.multi_reduction <add>, %116, %cst_38 [1] : vector<8x128xf32> to vector<8xf32>
    %120 = vector.shape_cast %119 : vector<8xf32> to vector<8x1xf32>
    %cst_39 = arith.constant 1.280000e+02 : f32
    %121 = vector.broadcast %cst_39 : f32 to vector<8x1xf32>
    %122 = arith.divf %120, %121 : vector<8x1xf32>
    %123 = vector.broadcast %122 : vector<8x1xf32> to vector<8x128xf32>
    %124 = arith.subf %116, %123 : vector<8x128xf32>
    %125 = arith.mulf %124, %124 : vector<8x128xf32>
    %cst_40 = arith.constant dense<0.000000e+00> : vector<8xf32>
    %126 = vector.multi_reduction <add>, %125, %cst_40 [1] : vector<8x128xf32> to vector<8xf32>
    %127 = vector.shape_cast %126 : vector<8xf32> to vector<8x1xf32>
    %cst_41 = arith.constant 1.280000e+02 : f32
    %128 = vector.broadcast %cst_41 : f32 to vector<8x1xf32>
    %129 = arith.divf %127, %128 : vector<8x1xf32>
    %cst_42 = arith.constant 9.99999996E-13 : f32
    %130 = vector.broadcast %cst_42 : f32 to vector<8x1xf32>
    %131 = arith.addf %129, %130 : vector<8x1xf32>
    %132 = math.rsqrt %131 : vector<8x1xf32>
    %133 = vector.broadcast %132 : vector<8x1xf32> to vector<8x128xf32>
    %134 = arith.mulf %124, %133 : vector<8x128xf32>
    %135 = vector.broadcast %117 : vector<1x128xf32> to vector<8x128xf32>
    %136 = arith.mulf %134, %135 : vector<8x128xf32>
    %137 = vector.broadcast %118 : vector<1x128xf32> to vector<8x128xf32>
    %138 = arith.addf %136, %137 : vector<8x128xf32>
    %139 = arith.truncf %138 : vector<8x128xf32> to vector<8x128xbf16>
    %c0_43 = arith.constant 0 : index
    %c0_44 = arith.constant 0 : index
    %c0_45 = arith.constant 0 : index
    %140 = vector.load %arg8[%c0_43, %c0_44, %c0_45] : memref<1x128x512xbf16, #tpu.memory_space<vmem>>, vector<1x128x512xbf16>
    %141 = vector.shape_cast %140 : vector<1x128x512xbf16> to vector<128x512xbf16>
    %cst_46 = arith.constant dense<0.000000e+00> : vector<8x512xf32>
    %142 = tpu.matmul %139, %141, %cst_46 {dimension_numbers = #tpu.dot_dimension_numbers<[1], [0], [0], [1], [0, 0, 1, 1], [], []>} : vector<8x128xbf16>, vector<128x512xbf16>, vector<8x512xf32> -> vector<8x512xf32>
    %c0_47 = arith.constant 0 : index
    %c0_48 = arith.constant 0 : index
    %c0_49 = arith.constant 0 : index
    %143 = vector.load %arg9[%c0_47, %c0_48, %c0_49] : memref<1x1x512xf32, #tpu.memory_space<vmem>>, vector<1x1x512xf32>
    %144 = vector.shape_cast %143 : vector<1x1x512xf32> to vector<1x512xf32>
    %145 = vector.broadcast %144 : vector<1x512xf32> to vector<8x512xf32>
    %146 = arith.addf %142, %145 : vector<8x512xf32>
    %cst_50 = arith.constant 5.000000e-01 : f32
    %147 = vector.broadcast %cst_50 : f32 to vector<8x512xf32>
    %148 = arith.mulf %147, %146 : vector<8x512xf32>
    %cst_51 = arith.constant 0.707106769 : f32
    %149 = vector.broadcast %cst_51 : f32 to vector<8x512xf32>
    %150 = arith.mulf %146, %149 : vector<8x512xf32>
    %151 = math.absf %150 : vector<8x512xf32>
    %cst_52 = arith.constant 0.327591091 : f32
    %152 = vector.broadcast %cst_52 : f32 to vector<8x512xf32>
    %153 = arith.mulf %152, %151 : vector<8x512xf32>
    %cst_53 = arith.constant 1.000000e+00 : f32
    %154 = vector.broadcast %cst_53 : f32 to vector<8x512xf32>
    %155 = arith.addf %154, %153 : vector<8x512xf32>
    %156 = tpu.reciprocal %155 {approx = true} : vector<8x512xf32> -> vector<8x512xf32>
    %cst_54 = arith.constant 1.06140542 : f32
    %157 = vector.broadcast %cst_54 : f32 to vector<8x512xf32>
    %158 = arith.mulf %156, %157 : vector<8x512xf32>
    %cst_55 = arith.constant -1.45315206 : f32
    %159 = vector.broadcast %cst_55 : f32 to vector<8x512xf32>
    %160 = arith.addf %159, %158 : vector<8x512xf32>
    %161 = arith.mulf %156, %160 : vector<8x512xf32>
    %cst_56 = arith.constant 1.42141378 : f32
    %162 = vector.broadcast %cst_56 : f32 to vector<8x512xf32>
    %163 = arith.addf %162, %161 : vector<8x512xf32>
    %164 = arith.mulf %156, %163 : vector<8x512xf32>
    %cst_57 = arith.constant -0.284496725 : f32
    %165 = vector.broadcast %cst_57 : f32 to vector<8x512xf32>
    %166 = arith.addf %165, %164 : vector<8x512xf32>
    %167 = arith.mulf %156, %166 : vector<8x512xf32>
    %cst_58 = arith.constant 0.254829586 : f32
    %168 = vector.broadcast %cst_58 : f32 to vector<8x512xf32>
    %169 = arith.addf %168, %167 : vector<8x512xf32>
    %170 = arith.mulf %156, %169 : vector<8x512xf32>
    %cst_59 = arith.constant 0.000000e+00 : f32
    %171 = vector.broadcast %cst_59 : f32 to vector<8x512xf32>
    %172 = arith.subf %171, %151 : vector<8x512xf32>
    %173 = arith.mulf %172, %151 : vector<8x512xf32>
    %174 = math.exp %173 : vector<8x512xf32>
    %175 = arith.mulf %170, %174 : vector<8x512xf32>
    %cst_60 = arith.constant 1.000000e+00 : f32
    %176 = vector.broadcast %cst_60 : f32 to vector<8x512xf32>
    %177 = arith.subf %176, %175 : vector<8x512xf32>
    %cst_61 = arith.constant 0.000000e+00 : f32
    %178 = vector.broadcast %cst_61 : f32 to vector<8x512xf32>
    %179 = arith.cmpf oge, %150, %178 : vector<8x512xf32>
    %cst_62 = arith.constant 0.000000e+00 : f32
    %180 = vector.broadcast %cst_62 : f32 to vector<8x512xf32>
    %181 = arith.subf %180, %177 : vector<8x512xf32>
    %182 = arith.select %179, %177, %181 : vector<8x512xi1>, vector<8x512xf32>
    %cst_63 = arith.constant 1.000000e+00 : f32
    %183 = vector.broadcast %cst_63 : f32 to vector<8x512xf32>
    %184 = arith.addf %183, %182 : vector<8x512xf32>
    %185 = arith.mulf %148, %184 : vector<8x512xf32>
    %186 = arith.truncf %185 : vector<8x512xf32> to vector<8x512xbf16>
    %c0_64 = arith.constant 0 : index
    %c0_65 = arith.constant 0 : index
    %c0_66 = arith.constant 0 : index
    %187 = vector.load %arg10[%c0_64, %c0_65, %c0_66] : memref<1x512x128xbf16, #tpu.memory_space<vmem>>, vector<1x512x128xbf16>
    %188 = vector.shape_cast %187 : vector<1x512x128xbf16> to vector<512x128xbf16>
    %cst_67 = arith.constant dense<0.000000e+00> : vector<8x128xf32>
    %189 = tpu.matmul %186, %188, %cst_67 {dimension_numbers = #tpu.dot_dimension_numbers<[1], [0], [0], [1], [0, 0, 1, 1], [], []>} : vector<8x512xbf16>, vector<512x128xbf16>, vector<8x128xf32> -> vector<8x128xf32>
    %190 = vector.extract_strided_slice %108 {offsets = [3, 0], sizes = [1, 128], strides = [1, 1]} : vector<6x128xf32> to vector<1x128xf32>
    %191 = vector.broadcast %190 : vector<1x128xf32> to vector<8x128xf32>
    %192 = arith.addf %189, %191 : vector<8x128xf32>
    %193 = arith.addf %138, %192 : vector<8x128xf32>
    %194 = vector.extract_strided_slice %108 {offsets = [4, 0], sizes = [1, 128], strides = [1, 1]} : vector<6x128xf32> to vector<1x128xf32>
    %195 = vector.extract_strided_slice %108 {offsets = [5, 0], sizes = [1, 128], strides = [1, 1]} : vector<6x128xf32> to vector<1x128xf32>
    %cst_68 = arith.constant dense<0.000000e+00> : vector<8xf32>
    %196 = vector.multi_reduction <add>, %193, %cst_68 [1] : vector<8x128xf32> to vector<8xf32>
    %197 = vector.shape_cast %196 : vector<8xf32> to vector<8x1xf32>
    %cst_69 = arith.constant 1.280000e+02 : f32
    %198 = vector.broadcast %cst_69 : f32 to vector<8x1xf32>
    %199 = arith.divf %197, %198 : vector<8x1xf32>
    %200 = vector.broadcast %199 : vector<8x1xf32> to vector<8x128xf32>
    %201 = arith.subf %193, %200 : vector<8x128xf32>
    %202 = arith.mulf %201, %201 : vector<8x128xf32>
    %cst_70 = arith.constant dense<0.000000e+00> : vector<8xf32>
    %203 = vector.multi_reduction <add>, %202, %cst_70 [1] : vector<8x128xf32> to vector<8xf32>
    %204 = vector.shape_cast %203 : vector<8xf32> to vector<8x1xf32>
    %cst_71 = arith.constant 1.280000e+02 : f32
    %205 = vector.broadcast %cst_71 : f32 to vector<8x1xf32>
    %206 = arith.divf %204, %205 : vector<8x1xf32>
    %cst_72 = arith.constant 9.99999996E-13 : f32
    %207 = vector.broadcast %cst_72 : f32 to vector<8x1xf32>
    %208 = arith.addf %206, %207 : vector<8x1xf32>
    %209 = math.rsqrt %208 : vector<8x1xf32>
    %210 = vector.broadcast %209 : vector<8x1xf32> to vector<8x128xf32>
    %211 = arith.mulf %201, %210 : vector<8x128xf32>
    %212 = vector.broadcast %194 : vector<1x128xf32> to vector<8x128xf32>
    %213 = arith.mulf %211, %212 : vector<8x128xf32>
    %214 = vector.broadcast %195 : vector<1x128xf32> to vector<8x128xf32>
    %215 = arith.addf %213, %214 : vector<8x128xf32>
    %c0_73 = arith.constant 0 : index
    %c0_74 = arith.constant 0 : index
    %216 = vector.load %arg15[%c0_73, %c0_74] : memref<8x128xf32, #tpu.memory_space<vmem>>, vector<8x128xf32>
    tpu.vector_store %arg15[%c0_73, %c0_74], %215 {strides = array<i32>} : memref<8x128xf32, #tpu.memory_space<vmem>>, vector<8x128xf32>,
    %c1_i32 = arith.constant 1 : i32
    %217 = arith.cmpi eq, %arg1, %c1_i32 : i32
    %218 = arith.extui %217 : i1 to i32
    %c0_i32_75 = arith.constant 0 : i32
    %219 = arith.cmpi ne, %218, %c0_i32_75 : i32
    scf.if %219 {
      %220 = vector.extract_strided_slice %215 {offsets = [0, 0], sizes = [1, 128], strides = [1, 1]} : vector<8x128xf32> to vector<1x128xf32>
      %221 = arith.truncf %220 : vector<1x128xf32> to vector<1x128xbf16>
      %c0_76 = arith.constant 0 : index
      %c0_77 = arith.constant 0 : index
      %222 = vector.load %arg12[%c0_76, %c0_77] : memref<128x128xbf16, #tpu.memory_space<vmem>>, vector<128x128xbf16>
      %cst_78 = arith.constant dense<0.000000e+00> : vector<1x128xf32>
      %223 = tpu.matmul %221, %222, %cst_78 {dimension_numbers = #tpu.dot_dimension_numbers<[1], [0], [0], [1], [0, 0, 1, 1], [], []>} : vector<1x128xbf16>, vector<128x128xbf16>, vector<1x128xf32> -> vector<1x128xf32>
      %c0_79 = arith.constant 0 : index
      %c0_80 = arith.constant 0 : index
      %224 = vector.load %arg13[%c0_79, %c0_80] : memref<1x128xf32, #tpu.memory_space<vmem>>, vector<1x128xf32>
      %225 = arith.addf %223, %224 : vector<1x128xf32>
      %c0_81 = arith.constant 0 : index
      %c0_82 = arith.constant 0 : index
      %c0_83 = arith.constant 0 : index
      %226 = vector.load %arg14[%c0_81, %c0_82, %c0_83] : memref<1x1x128xf32, #tpu.memory_space<vmem>>, vector<1x1x128xf32>
      %227 = vector.shape_cast %226 : vector<1x1x128xf32> to vector<1x128xf32>
      %228 = vector.shape_cast %225 : vector<1x128xf32> to vector<1x1x128xf32>
      tpu.vector_store %arg14[%c0_81, %c0_82, %c0_83], %228 {strides = array<i32>} : memref<1x1x128xf32, #tpu.memory_space<vmem>>, vector<1x1x128xf32>,
    } else {
    }
    return
  }
  func.func @transform_0(%arg0: i32, %arg1: i32) -> (i32, i32, i32) {
    %c0_i32 = arith.constant 0 : i32
    %c0_i32_0 = arith.constant 0 : i32
    %c0_i32_1 = arith.constant 0 : i32
    return %arg0, %c0_i32, %c0_i32_0 : i32, i32, i32
  }
  func.func @transform_1(%arg0: i32, %arg1: i32) -> (i32, i32, i32) {
    %c0_i32 = arith.constant 0 : i32
    %c0_i32_0 = arith.constant 0 : i32
    %c0_i32_1 = arith.constant 0 : i32
    return %arg0, %c0_i32, %c0_i32_0 : i32, i32, i32
  }
  func.func @transform_2(%arg0: i32, %arg1: i32) -> (i32, i32) {
    %c0_i32 = arith.constant 0 : i32
    %c0_i32_0 = arith.constant 0 : i32
    %c0_i32_1 = arith.constant 0 : i32
    return %c0_i32, %c0_i32_0 : i32, i32
  }
  func.func @transform_3(%arg0: i32, %arg1: i32) -> (i32, i32, i32) {
    %c0_i32 = arith.constant 0 : i32
    %c0_i32_0 = arith.constant 0 : i32
    %c0_i32_1 = arith.constant 0 : i32
    return %arg1, %c0_i32, %c0_i32_0 : i32, i32, i32
  }
  func.func @transform_4(%arg0: i32, %arg1: i32) -> (i32, i32, i32) {
    %c0_i32 = arith.constant 0 : i32
    %c0_i32_0 = arith.constant 0 : i32
    %c0_i32_1 = arith.constant 0 : i32
    return %arg1, %c0_i32, %c0_i32_0 : i32, i32, i32
  }
  func.func @transform_5(%arg0: i32, %arg1: i32) -> (i32, i32, i32) {
    %c0_i32 = arith.constant 0 : i32
    %c0_i32_0 = arith.constant 0 : i32
    %c0_i32_1 = arith.constant 0 : i32
    return %arg1, %c0_i32, %c0_i32_0 : i32, i32, i32
  }
  func.func @transform_6(%arg0: i32, %arg1: i32) -> (i32, i32, i32) {
    %c0_i32 = arith.constant 0 : i32
    %c0_i32_0 = arith.constant 0 : i32
    %c0_i32_1 = arith.constant 0 : i32
    return %arg1, %c0_i32, %c0_i32_0 : i32, i32, i32
  }
  func.func @transform_7(%arg0: i32, %arg1: i32) -> (i32, i32, i32) {
    %c0_i32 = arith.constant 0 : i32
    %c0_i32_0 = arith.constant 0 : i32
    %c0_i32_1 = arith.constant 0 : i32
    return %arg1, %c0_i32, %c0_i32_0 : i32, i32, i32
  }
  func.func @transform_8(%arg0: i32, %arg1: i32) -> (i32, i32, i32) {
    %c0_i32 = arith.constant 0 : i32
    %c0_i32_0 = arith.constant 0 : i32
    %c0_i32_1 = arith.constant 0 : i32
    return %arg1, %c0_i32, %c0_i32_0 : i32, i32, i32
  }
  func.func @transform_9(%arg0: i32, %arg1: i32) -> (i32, i32, i32) {
    %c0_i32 = arith.constant 0 : i32
    %c0_i32_0 = arith.constant 0 : i32
    %c0_i32_1 = arith.constant 0 : i32
    return %arg1, %c0_i32, %c0_i32_0 : i32, i32, i32
  }
  func.func @transform_10(%arg0: i32, %arg1: i32) -> (i32, i32) {
    %c0_i32 = arith.constant 0 : i32
    %c0_i32_0 = arith.constant 0 : i32
    %c0_i32_1 = arith.constant 0 : i32
    return %c0_i32, %c0_i32_0 : i32, i32
  }
  func.func @transform_11(%arg0: i32, %arg1: i32) -> (i32, i32) {
    %c0_i32 = arith.constant 0 : i32
    %c0_i32_0 = arith.constant 0 : i32
    %c0_i32_1 = arith.constant 0 : i32
    return %c0_i32, %c0_i32_0 : i32, i32
  }
  func.func @transform_12(%arg0: i32, %arg1: i32) -> (i32, i32, i32) {
    %c0_i32 = arith.constant 0 : i32
    %c0_i32_0 = arith.constant 0 : i32
    %c0_i32_1 = arith.constant 0 : i32
    return %arg0, %c0_i32, %c0_i32_0 : i32, i32, i32
  }
}

</mosaic_0001>

<llo_original>
// kernel: koelectra_multilabel_forward.1
$region0: #{koelectra_multilabel_forward.1}
  #allocation0 [shape = 'u32[]', space=smem, size = 0x4, offset = 0x4, fixed_abs, tag = 'smem constant byte address 0x4 - core index']
  #allocation1 [shape = 'u32[72,128]{1,0:T(1,128)}', space=vmem, size = 0x9000, scoped, tag = 'internal scratch']
  #allocation2 [shape = 'f32[8,128]{1,0:T(8,128)}', space=vmem, size = 0x1000, scoped, tag = 'scratch operand']
  %s0 = inlined_call_operand.vmem [shape: f32[2,8,128], index: 0, kind: input, shape index: {}]
  %s1 = inlined_call_operand.vmem [shape: f32[2,1,8], index: 1, kind: input, shape index: {}]
  %s2 = inlined_call_operand.vmem [shape: f32[2,128], index: 2, kind: input, shape index: {}]
  %s3 = inlined_call_operand.hbm [shape: bf16[2,128,384], index: 3, kind: input, shape index: {}]
  %s4 = inlined_call_operand.vmem [shape: f32[2,1,384], index: 4, kind: input, shape index: {}]
  %s5 = inlined_call_operand.vmem [shape: bf16[2,128,128], index: 5, kind: input, shape index: {}]
  %s6 = inlined_call_operand.hbm [shape: bf16[2,128,512], index: 6, kind: input, shape index: {}]
  %s7 = inlined_call_operand.vmem [shape: f32[2,1,512], index: 7, kind: input, shape index: {}]
  %s8 = inlined_call_operand.hbm [shape: bf16[2,512,128], index: 8, kind: input, shape index: {}]
  %s9 = inlined_call_operand.vmem [shape: f32[2,6,128], index: 9, kind: input, shape index: {}]
  %s10 = inlined_call_operand.hbm [shape: bf16[128,128], index: 10, kind: input, shape index: {}]
  %s11 = inlined_call_operand.vmem [shape: f32[1,128], index: 11, kind: input, shape index: {}]
  %s12 = inlined_call_operand.hbm [shape: f32[2,1,128], index: 12, kind: output, shape index: {}]
  %s13 = sld [smem:[#allocation0]]
  $region105: #{koelectra_multilabel_forward.1} parent=0
    _
  %s15 = ssub.s32 1, %s13
  %s16 = scalar_select 0, %s15, %s13
  $region1: #{koelectra_multilabel_forward.1} parent=0
    #allocation3 [shape = 'u8[196608]{0}', space=vmem, size = 0x30000, scoped, tag = 'input window, operand 3']
    #allocation4 [shape = 's32[2]{0}', space=sflag, size = 0x8, scoped, tag = 'scoped memory for koelectra_multilabel_forward.1']
    #allocation5 [shape = 's32[2]{0}', space=sflag, size = 0x8, scoped, tag = 'scoped memory for koelectra_multilabel_forward.1']
    #allocation6 [shape = 'u8[262144]{0}', space=vmem, size = 0x40000, scoped, tag = 'input window, operand 6']
    #allocation7 [shape = 's32[2]{0}', space=sflag, size = 0x8, scoped, tag = 'scoped memory for koelectra_multilabel_forward.1']
    #allocation8 [shape = 'u8[262144]{0}', space=vmem, size = 0x40000, scoped, tag = 'input window, operand 8']
    #allocation9 [shape = 'u8[32768]{0}', space=vmem, size = 0x8000, scoped, tag = 'input window, operand 10, single buffered']
    #allocation10 [shape = 's32[1]{0}', space=sflag, size = 0x4, scoped, tag = 'scoped memory for koelectra_multilabel_forward.1']
    #allocation11 [shape = 'u8[1024]{0}', space=vmem, size = 0x400, scoped, tag = 'output window, operand 0']
    %17 = vsyncpa [#allocation4], 0
    %s18 = scalar_lea.sflag [#allocation4], 1
    %19 = vsyncpa %s18, 0
    %20 = vsyncpa [#allocation7], 0
    %s21 = scalar_lea.sflag [#allocation7], 1
    %22 = vsyncpa %s21, 0
    %23 = vsyncpa [#allocation10], 0
    %24 = vsyncpa [#allocation5], 0
    %s25 = scalar_lea.sflag [#allocation5], 1
    %26 = vsyncpa %s25, 0
    loop: start=0, step=1, limit=6
    $region2: #{koelectra_multilabel_forward.1} parent=1 // loop_pre_header
      _
    $region3: #{koelectra_multilabel_forward.1} parent=1 // loop_header
      %s28 = sphi 0, %s32
      %p29 = scmp.ge.s32.totalorder %s28, 6
      %s35 = sphi 0, %s47
      %s36 = sphi 0, %s43
      %s37 = sphi 0, %s35
      %s38 = sphi 0, %s36
      %s39 = sphi 0, %s37
      %s40 = sphi 0, %s38
      %s50 = sphi 0, %s52
      %s53 = sphi 0, %s50
      %s54 = sphi 0, %s53
      %s70 = sphi 0, %s54
      %s76 = sphi 0, %s78
      %s79 = sphi 0, %s76
      %s80 = sphi 0, %s79
      %s96 = sphi 0, %s80
      %s100 = sphi 0, %s100
      %s102 = sphi 0, %s100
      %s103 = sphi 0, %s102
      %s117 = sphi 0, %s103
      %s123 = sphi 0, %s125
      %s126 = sphi 0, %s123
      %s127 = sphi 0, %s126
      %s143 = sphi 0, %s127
      %s149 = sphi 0, %s151
      %s152 = sphi 0, %s149
      %s153 = sphi 0, %s152
      %s169 = sphi 0, %s153
      %s175 = sphi 0, %s177
      %s178 = sphi 0, %s175
      %s179 = sphi 0, %s178
      %s195 = sphi 0, %s179
      %s201 = sphi 0, %s203
      %s204 = sphi 0, %s201
      %s205 = sphi 0, %s204
      %s221 = sphi 0, %s205
      %s227 = sphi 0, %s229
      %s230 = sphi 0, %s227
      %s231 = sphi 0, %s230
      %s247 = sphi 0, %s231
      %s253 = sphi 0, %s255
      %s256 = sphi 0, %s253
      %s257 = sphi 0, %s256
      %s273 = sphi 0, %s257
      %s279 = sphi 0, %s281
      %s282 = sphi 0, %s279
      %s283 = sphi 0, %s282
      %s299 = sphi 0, %s283
      %s303 = sphi 0, %s303
      %s305 = sphi 0, %s303
      %s306 = sphi 0, %s305
      %s320 = sphi 0, %s306
      %s324 = sphi 0, %s324
      %s326 = sphi 0, %s324
      %s327 = sphi 0, %s326
      %s341 = sphi 0, %s327
      %s347 = sphi 0, %s349
      %s350 = sphi 0, %s347
      %s351 = sphi 0, %s350
      %s367 = sphi 0, %s351
    $region4: #{koelectra_multilabel_forward.1} parent=1 // loop_header_branch
      %31 = sbr.rel (%p29) target = $region8
    $region5: #{koelectra_multilabel_forward.1} parent=1 // loop_body
      %s33 = ssub.s32 %s28, 1
      %s34 = ssub.s32 %s28, 2
      %s41 = sadd.s32 1, %s36
      %p42 = scmp.ge.s32.totalorder %s41, 2
      %s43 = scalar_select %p42, 0, %s41
      %s44 = sadd.s32 1, %s35
      %s45 = scalar_select %p42, %s44, %s35
      %p46 = scmp.ge.s32.totalorder %s45, 2
      %s47 = scalar_select %p46, 0, %s45
      %s48 = ssub.s32 %s35, %s47
      %p49 = scmp.eq.s32.totalorder %s48, 0
      %s51 = sadd.s32 %s50, 1
      %s52 = scalar_select %p49, %s50, %s51
      %p55 = pneg %p49
      %p56 = scmp.eq.s32.totalorder %s28, 3
      %p57 = por %p55, %p56
      %p58 = scmp.ne.s32.totalorder %s50, %s53
      %p59 = scmp.eq.s32.totalorder %s28, 0
      %p60 = por %p58, %p59
      %p61 = scmp.ne.s32.totalorder %s50, %s53
      %p62 = scmp.eq.s32.totalorder %s33, 3
      %p63 = por %p61, %p62
      %p64 = scmp.ne.s32.totalorder %s53, %s54
      %p65 = scmp.eq.s32.totalorder %s33, 0
      %p66 = por %p64, %p65
      %p67 = scmp.ne.s32.totalorder %s53, %s54
      %p68 = scmp.eq.s32.totalorder %s34, 3
      %p69 = por %p67, %p68
      %p71 = scmp.ne.s32.totalorder %s54, %s70
      %p72 = scmp.eq.s32.totalorder %s34, 0
      %p73 = por %p71, %p72
      %s74 = ssub.s32 %s35, %s47
      %p75 = scmp.eq.s32.totalorder %s74, 0
      %s77 = sadd.s32 %s76, 1
      %s78 = scalar_select %p75, %s76, %s77
      %p81 = pneg %p75
      %p82 = scmp.eq.s32.totalorder %s28, 3
      %p83 = por %p81, %p82
      %p84 = scmp.ne.s32.totalorder %s76, %s79
      %p85 = scmp.eq.s32.totalorder %s28, 0
      %p86 = por %p84, %p85
      %p87 = scmp.ne.s32.totalorder %s76, %s79
      %p88 = scmp.eq.s32.totalorder %s33, 3
      %p89 = por %p87, %p88
      %p90 = scmp.ne.s32.totalorder %s79, %s80
      %p91 = scmp.eq.s32.totalorder %s33, 0
      %p92 = por %p90, %p91
      %p93 = scmp.ne.s32.totalorder %s79, %s80
      %p94 = scmp.eq.s32.totalorder %s34, 3
      %p95 = por %p93, %p94
      %p97 = scmp.ne.s32.totalorder %s80, %s96
      %p98 = scmp.eq.s32.totalorder %s34, 0
      %p99 = por %p97, %p98
      %s101 = sadd.s32 %s100, 1
      %p104 = scmp.eq.s32.totalorder %s28, 3
      %p105 = scmp.ne.s32.totalorder %s100, %s102
      %p106 = scmp.eq.s32.totalorder %s28, 0
      %p107 = por %p105, %p106
      %p108 = scmp.ne.s32.totalorder %s100, %s102
      %p109 = scmp.eq.s32.totalorder %s33, 3
      %p110 = por %p108, %p109
      %p111 = scmp.ne.s32.totalorder %s102, %s103
      %p112 = scmp.eq.s32.totalorder %s33, 0
      %p113 = por %p111, %p112
      %p114 = scmp.ne.s32.totalorder %s102, %s103
      %p115 = scmp.eq.s32.totalorder %s34, 3
      %p116 = por %p114, %p115
      %p118 = scmp.ne.s32.totalorder %s103, %s117
      %p119 = scmp.eq.s32.totalorder %s34, 0
      %p120 = por %p118, %p119
      %s121 = ssub.s32 %s36, %s43
      %p122 = scmp.eq.s32.totalorder %s121, 0
      %s124 = sadd.s32 %s123, 1
      %s125 = scalar_select %p122, %s123, %s124
      %p128 = pneg %p122
      %p129 = scmp.eq.s32.totalorder %s28, 3
      %p130 = por %p128, %p129
      %p131 = scmp.ne.s32.totalorder %s123, %s126
      %p132 = scmp.eq.s32.totalorder %s28, 0
      %p133 = por %p131, %p132
      %p134 = scmp.ne.s32.totalorder %s123, %s126
      %p135 = scmp.eq.s32.totalorder %s33, 3
      %p136 = por %p134, %p135
      %p137 = scmp.ne.s32.totalorder %s126, %s127
      %p138 = scmp.eq.s32.totalorder %s33, 0
      %p139 = por %p137, %p138
      %p140 = scmp.ne.s32.totalorder %s126, %s127
      %p141 = scmp.eq.s32.totalorder %s34, 3
      %p142 = por %p140, %p141
      %p144 = scmp.ne.s32.totalorder %s127, %s143
      %p145 = scmp.eq.s32.totalorder %s34, 0
      %p146 = por %p144, %p145
      %s147 = ssub.s32 %s36, %s43
      %p148 = scmp.eq.s32.totalorder %s147, 0
      %s150 = sadd.s32 %s149, 1
      %s151 = scalar_select %p148, %s149, %s150
      %p154 = pneg %p148
      %p155 = scmp.eq.s32.totalorder %s28, 3
      %p156 = por %p154, %p155
      %p157 = scmp.ne.s32.totalorder %s149, %s152
      %p158 = scmp.eq.s32.totalorder %s28, 0
      %p159 = por %p157, %p158
      %p160 = scmp.ne.s32.totalorder %s149, %s152
      %p161 = scmp.eq.s32.totalorder %s33, 3
      %p162 = por %p160, %p161
      %p163 = scmp.ne.s32.totalorder %s152, %s153
      %p164 = scmp.eq.s32.totalorder %s33, 0
      %p165 = por %p163, %p164
      %p166 = scmp.ne.s32.totalorder %s152, %s153
      %p167 = scmp.eq.s32.totalorder %s34, 3
      %p168 = por %p166, %p167
      %p170 = scmp.ne.s32.totalorder %s153, %s169
      %p171 = scmp.eq.s32.totalorder %s34, 0
      %p172 = por %p170, %p171
      %s173 = ssub.s32 %s36, %s43
      %p174 = scmp.eq.s32.totalorder %s173, 0
      %s176 = sadd.s32 %s175, 1
      %s177 = scalar_select %p174, %s175, %s176
      %p180 = pneg %p174
      %p181 = scmp.eq.s32.totalorder %s28, 3
      %p182 = por %p180, %p181
      %p183 = scmp.ne.s32.totalorder %s175, %s178
      %p184 = scmp.eq.s32.totalorder %s28, 0
      %p185 = por %p183, %p184
      %p186 = scmp.ne.s32.totalorder %s175, %s178
      %p187 = scmp.eq.s32.totalorder %s33, 3
      %p188 = por %p186, %p187
      %p189 = scmp.ne.s32.totalorder %s178, %s179
      %p190 = scmp.eq.s32.totalorder %s33, 0
      %p191 = por %p189, %p190
      %p192 = scmp.ne.s32.totalorder %s178, %s179
      %p193 = scmp.eq.s32.totalorder %s34, 3
      %p194 = por %p192, %p193
      %p196 = scmp.ne.s32.totalorder %s179, %s195
      %p197 = scmp.eq.s32.totalorder %s34, 0
      %p198 = por %p196, %p197
      %s199 = ssub.s32 %s36, %s43
      %p200 = scmp.eq.s32.totalorder %s199, 0
      %s202 = sadd.s32 %s201, 1
      %s203 = scalar_select %p200, %s201, %s202
      %p206 = pneg %p200
      %p207 = scmp.eq.s32.totalorder %s28, 3
      %p208 = por %p206, %p207
      %p209 = scmp.ne.s32.totalorder %s201, %s204
      %p210 = scmp.eq.s32.totalorder %s28, 0
      %p211 = por %p209, %p210
      %p212 = scmp.ne.s32.totalorder %s201, %s204
      %p213 = scmp.eq.s32.totalorder %s33, 3
      %p214 = por %p212, %p213
      %p215 = scmp.ne.s32.totalorder %s204, %s205
      %p216 = scmp.eq.s32.totalorder %s33, 0
      %p217 = por %p215, %p216
      %p218 = scmp.ne.s32.totalorder %s204, %s205
      %p219 = scmp.eq.s32.totalorder %s34, 3
      %p220 = por %p218, %p219
      %p222 = scmp.ne.s32.totalorder %s205, %s221
      %p223 = scmp.eq.s32.totalorder %s34, 0
      %p224 = por %p222, %p223
      %s225 = ssub.s32 %s36, %s43
      %p226 = scmp.eq.s32.totalorder %s225, 0
      %s228 = sadd.s32 %s227, 1
      %s229 = scalar_select %p226, %s227, %s228
      %p232 = pneg %p226
      %p233 = scmp.eq.s32.totalorder %s28, 3
      %p234 = por %p232, %p233
      %p235 = scmp.ne.s32.totalorder %s227, %s230
      %p236 = scmp.eq.s32.totalorder %s28, 0
      %p237 = por %p235, %p236
      %p238 = scmp.ne.s32.totalorder %s227, %s230
      %p239 = scmp.eq.s32.totalorder %s33, 3
      %p240 = por %p238, %p239
      %p241 = scmp.ne.s32.totalorder %s230, %s231
      %p242 = scmp.eq.s32.totalorder %s33, 0
      %p243 = por %p241, %p242
      %p244 = scmp.ne.s32.totalorder %s230, %s231
      %p245 = scmp.eq.s32.totalorder %s34, 3
      %p246 = por %p244, %p245
      %p248 = scmp.ne.s32.totalorder %s231, %s247
      %p249 = scmp.eq.s32.totalorder %s34, 0
      %p250 = por %p248, %p249
      %s251 = ssub.s32 %s36, %s43
      %p252 = scmp.eq.s32.totalorder %s251, 0
      %s254 = sadd.s32 %s253, 1
      %s255 = scalar_select %p252, %s253, %s254
      %p258 = pneg %p252
      %p259 = scmp.eq.s32.totalorder %s28, 3
      %p260 = por %p258, %p259
      %p261 = scmp.ne.s32.totalorder %s253, %s256
      %p262 = scmp.eq.s32.totalorder %s28, 0
      %p263 = por %p261, %p262
      %p264 = scmp.ne.s32.totalorder %s253, %s256
      %p265 = scmp.eq.s32.totalorder %s33, 3
      %p266 = por %p264, %p265
      %p267 = scmp.ne.s32.totalorder %s256, %s257
      %p268 = scmp.eq.s32.totalorder %s33, 0
      %p269 = por %p267, %p268
      %p270 = scmp.ne.s32.totalorder %s256, %s257
      %p271 = scmp.eq.s32.totalorder %s34, 3
      %p272 = por %p270, %p271
      %p274 = scmp.ne.s32.totalorder %s257, %s273
      %p275 = scmp.eq.s32.totalorder %s34, 0
      %p276 = por %p274, %p275
      %s277 = ssub.s32 %s36, %s43
      %p278 = scmp.eq.s32.totalorder %s277, 0
      %s280 = sadd.s32 %s279, 1
      %s281 = scalar_select %p278, %s279, %s280
      %p284 = pneg %p278
      %p285 = scmp.eq.s32.totalorder %s28, 3
      %p286 = por %p284, %p285
      %p287 = scmp.ne.s32.totalorder %s279, %s282
      %p288 = scmp.eq.s32.totalorder %s28, 0
      %p289 = por %p287, %p288
      %p290 = scmp.ne.s32.totalorder %s279, %s282
      %p291 = scmp.eq.s32.totalorder %s33, 3
      %p292 = por %p290, %p291
      %p293 = scmp.ne.s32.totalorder %s282, %s283
      %p294 = scmp.eq.s32.totalorder %s33, 0
      %p295 = por %p293, %p294
      %p296 = scmp.ne.s32.totalorder %s282, %s283
      %p297 = scmp.eq.s32.totalorder %s34, 3
      %p298 = por %p296, %p297
      %p300 = scmp.ne.s32.totalorder %s283, %s299
      %p301 = scmp.eq.s32.totalorder %s34, 0
      %p302 = por %p300, %p301
      %s304 = sadd.s32 %s303, 1
      %p307 = scmp.eq.s32.totalorder %s28, 3
      %p308 = scmp.ne.s32.totalorder %s303, %s305
      %p309 = scmp.eq.s32.totalorder %s28, 0
      %p310 = por %p308, %p309
      %p311 = scmp.ne.s32.totalorder %s303, %s305
      %p312 = scmp.eq.s32.totalorder %s33, 3
      %p313 = por %p311, %p312
      %p314 = scmp.ne.s32.totalorder %s305, %s306
      %p315 = scmp.eq.s32.totalorder %s33, 0
      %p316 = por %p314, %p315
      %p317 = scmp.ne.s32.totalorder %s305, %s306
      %p318 = scmp.eq.s32.totalorder %s34, 3
      %p319 = por %p317, %p318
      %p321 = scmp.ne.s32.totalorder %s306, %s320
      %p322 = scmp.eq.s32.totalorder %s34, 0
      %p323 = por %p321, %p322
      %s325 = sadd.s32 %s324, 1
      %p328 = scmp.eq.s32.totalorder %s28, 3
      %p329 = scmp.ne.s32.totalorder %s324, %s326
      %p330 = scmp.eq.s32.totalorder %s28, 0
      %p331 = por %p329, %p330
      %p332 = scmp.ne.s32.totalorder %s324, %s326
      %p333 = scmp.eq.s32.totalorder %s33, 3
      %p334 = por %p332, %p333
      %p335 = scmp.ne.s32.totalorder %s326, %s327
      %p336 = scmp.eq.s32.totalorder %s33, 0
      %p337 = por %p335, %p336
      %p338 = scmp.ne.s32.totalorder %s326, %s327
      %p339 = scmp.eq.s32.totalorder %s34, 3
      %p340 = por %p338, %p339
      %p342 = scmp.ne.s32.totalorder %s327, %s341
      %p343 = scmp.eq.s32.totalorder %s34, 0
      %p344 = por %p342, %p343
      %s345 = ssub.s32 %s35, %s47
      %p346 = scmp.eq.s32.totalorder %s345, 0
      %s348 = sadd.s32 %s347, 1
      %s349 = scalar_select %p346, %s347, %s348
      %p352 = pneg %p346
      %p353 = scmp.eq.s32.totalorder %s28, 3
      %p354 = por %p352, %p353
      %p355 = scmp.ne.s32.totalorder %s347, %s350
      %p356 = scmp.eq.s32.totalorder %s28, 0
      %p357 = por %p355, %p356
      %p358 = scmp.ne.s32.totalorder %s347, %s350
      %p359 = scmp.eq.s32.totalorder %s33, 3
      %p360 = por %p358, %p359
      %p361 = scmp.ne.s32.totalorder %s350, %s351
      %p362 = scmp.eq.s32.totalorder %s33, 0
      %p363 = por %p361, %p362
      %p364 = scmp.ne.s32.totalorder %s350, %s351
      %p365 = scmp.eq.s32.totalorder %s34, 3
      %p366 = por %p364, %p365
      %p368 = scmp.ne.s32.totalorder %s351, %s367
      %p369 = scmp.eq.s32.totalorder %s34, 0
      %p370 = por %p368, %p369
      %p371 = scmp.le.s32.totalorder 1, %s28
      %p372 = scmp.lt.s32.totalorder %s28, 5
      %p373 = pnand %p371, %p372
      %p374 = pneg %p373
      // Predicated region
      $region9: #{koelectra_multilabel_forward.1} parent=5 // pred_check
        _
      $region10: #{koelectra_multilabel_forward.1} parent=5 // pred_check_branch
        %376 = sbr.rel (%p373) target = $region12
      $region11: #{koelectra_multilabel_forward.1} parent=5 // pred_region
        %s377 = ssub.s32 %s28, 1
        // Predicated region
        $region13: #{koelectra_multilabel_forward.1} parent=11 // pred_check
          %p378 = pneg %p113
        $region14: #{koelectra_multilabel_forward.1} parent=11 // pred_check_branch
          %380 = sbr.rel (%p378) target = $region16
        $region15: #{koelectra_multilabel_forward.1} parent=11 // pred_region
          _
        $region16: #{koelectra_multilabel_forward.1} parent=11 // pred_fallthru
          _
        // Predicated region
        $region17: #{koelectra_multilabel_forward.1} parent=11 // pred_check
          %p381 = pneg %p316
        $region18: #{koelectra_multilabel_forward.1} parent=11 // pred_check_branch
          %383 = sbr.rel (%p381) target = $region20
        $region19: #{koelectra_multilabel_forward.1} parent=11 // pred_region
          %385 = vsyncadd [#allocation10], 0
          %s386 = sshll.u32 %s10, 4
          %s387 = int_to_ptr.hbm [resolvable:$true] %s386
          %s388 = sshll.u32 [#allocation9], 4
          %s389 = int_to_ptr.vmem [resolvable:$true] %s388
          %394 = dma.hbm_to_vmem [thread:$0]  %s387, 1024, %s389, [#allocation10], 64, 64, 4
        $region20: #{koelectra_multilabel_forward.1} parent=11 // pred_fallthru
          _
        // Predicated region
        $region21: #{koelectra_multilabel_forward.1} parent=11 // pred_check
          %p395 = pneg %p337
        $region22: #{koelectra_multilabel_forward.1} parent=11 // pred_check_branch
          %397 = sbr.rel (%p395) target = $region24
        $region23: #{koelectra_multilabel_forward.1} parent=11 // pred_region
          _
        $region24: #{koelectra_multilabel_forward.1} parent=11 // pred_fallthru
          _
      $region12: #{koelectra_multilabel_forward.1} parent=5 // pred_fallthru
        _
      %p398 = scmp.lt.s32.totalorder %s28, 4
      // Predicated region
      $region25: #{koelectra_multilabel_forward.1} parent=5 // pred_check
        %p399 = pneg %p398
      $region26: #{koelectra_multilabel_forward.1} parent=5 // pred_check_branch
        %401 = sbr.rel (%p399) target = $region28
      $region27: #{koelectra_multilabel_forward.1} parent=5 // pred_region
        // Predicated region
        $region29: #{koelectra_multilabel_forward.1} parent=27 // pred_check
          %p402 = pneg %p60
        $region30: #{koelectra_multilabel_forward.1} parent=27 // pred_check_branch
          %404 = sbr.rel (%p402) target = $region32
        $region31: #{koelectra_multilabel_forward.1} parent=27 // pred_region
          %p405 = scmp.lt.s32.totalorder %s35, 1
          %s406 = scalar_select %p405, %s35, 1
          %s407 = smul.addr %s406, 8
          %s408 = scalar_lea.vmem %s0, %s407
        $region32: #{koelectra_multilabel_forward.1} parent=27 // pred_fallthru
          _
        // Predicated region
        $region33: #{koelectra_multilabel_forward.1} parent=27 // pred_check
          %p409 = pneg %p86
        $region34: #{koelectra_multilabel_forward.1} parent=27 // pred_check_branch
          %411 = sbr.rel (%p409) target = $region36
        $region35: #{koelectra_multilabel_forward.1} parent=27 // pred_region
          %p412 = scmp.lt.s32.totalorder %s35, 1
          %s413 = scalar_select %p412, %s35, 1
          %s414 = scalar_lea.vmem %s1, %s413
        $region36: #{koelectra_multilabel_forward.1} parent=27 // pred_fallthru
          _
        // Predicated region
        $region37: #{koelectra_multilabel_forward.1} parent=27 // pred_check
          %p415 = pneg %p133
        $region38: #{koelectra_multilabel_forward.1} parent=27 // pred_check_branch
          %417 = sbr.rel (%p415) target = $region40
        $region39: #{koelectra_multilabel_forward.1} parent=27 // pred_region
          %s418 = sand.u32 %s123, 1
          %s419 = scalar_lea.sflag [#allocation4], %s418
          %s420 = sand.u32 %s123, 1
          %s421 = smul.addr %s420, 192
          %s422 = scalar_lea.vmem [#allocation3], %s421
          %424 = vsyncadd %s419, 0
          %s425 = smul.addr %s36, 48
          %s426 = smul.addr %s425, 4
          %s427 = scalar_lea.hbm %s3, %s426
          %s428 = sshll.u32 %s427, 4
          %s429 = int_to_ptr.hbm [resolvable:$true] %s428
          %s430 = sshll.u32 %s422, 4
          %s431 = int_to_ptr.vmem [resolvable:$true] %s430
          %436 = dma.hbm_to_vmem [thread:$0]  %s429, 3072, %s431, %s419, 192, 192, 12
        $region40: #{koelectra_multilabel_forward.1} parent=27 // pred_fallthru
          _
        // Predicated region
        $region41: #{koelectra_multilabel_forward.1} parent=27 // pred_check
          %p437 = pneg %p159
        $region42: #{koelectra_multilabel_forward.1} parent=27 // pred_check_branch
          %439 = sbr.rel (%p437) target = $region44
        $region43: #{koelectra_multilabel_forward.1} parent=27 // pred_region
          %p440 = scmp.lt.s32.totalorder %s36, 1
          %s441 = scalar_select %p440, %s36, 1
          %s442 = smul.addr %s441, 3
          %s443 = scalar_lea.vmem %s4, %s442
        $region44: #{koelectra_multilabel_forward.1} parent=27 // pred_fallthru
          _
        // Predicated region
        $region45: #{koelectra_multilabel_forward.1} parent=27 // pred_check
          %p444 = pneg %p185
        $region46: #{koelectra_multilabel_forward.1} parent=27 // pred_check_branch
          %446 = sbr.rel (%p444) target = $region48
        $region47: #{koelectra_multilabel_forward.1} parent=27 // pred_region
          %p447 = scmp.lt.s32.totalorder %s36, 1
          %s448 = scalar_select %p447, %s36, 1
          %s449 = smul.addr %s448, 16
          %s450 = smul.addr %s449, 4
          %s451 = scalar_lea.vmem %s5, %s450
        $region48: #{koelectra_multilabel_forward.1} parent=27 // pred_fallthru
          _
        // Predicated region
        $region49: #{koelectra_multilabel_forward.1} parent=27 // pred_check
          %p452 = pneg %p211
        $region50: #{koelectra_multilabel_forward.1} parent=27 // pred_check_branch
          %454 = sbr.rel (%p452) target = $region52
        $region51: #{koelectra_multilabel_forward.1} parent=27 // pred_region
          %s455 = sand.u32 %s28, 1
          %s456 = scalar_lea.sflag [#allocation7], %s455
          %s457 = sand.u32 %s201, 1
          %s458 = smul.addr %s457, 256
          %s459 = scalar_lea.vmem [#allocation6], %s458
          %461 = vsyncadd %s456, 0
          %s462 = smul.addr %s36, 64
          %s463 = smul.addr %s462, 4
          %s464 = scalar_lea.hbm %s6, %s463
          %s465 = sshll.u32 %s464, 4
          %s466 = int_to_ptr.hbm [resolvable:$true] %s465
          %s467 = sshll.u32 %s459, 4
          %s468 = int_to_ptr.vmem [resolvable:$true] %s467
          %473 = dma.hbm_to_vmem [thread:$0]  %s466, 4096, %s468, %s456, 256, 256, 16
        $region52: #{koelectra_multilabel_forward.1} parent=27 // pred_fallthru
          _
        // Predicated region
        $region53: #{koelectra_multilabel_forward.1} parent=27 // pred_check
          %p474 = pneg %p237
        $region54: #{koelectra_multilabel_forward.1} parent=27 // pred_check_branch
          %476 = sbr.rel (%p474) target = $region56
        $region55: #{koelectra_multilabel_forward.1} parent=27 // pred_region
          %p477 = scmp.lt.s32.totalorder %s36, 1
          %s478 = scalar_select %p477, %s36, 1
          %s479 = smul.addr %s478, 4
          %s480 = scalar_lea.vmem %s7, %s479
        $region56: #{koelectra_multilabel_forward.1} parent=27 // pred_fallthru
          _
        // Predicated region
        $region57: #{koelectra_multilabel_forward.1} parent=27 // pred_check
          %p481 = pneg %p263
        $region58: #{koelectra_multilabel_forward.1} parent=27 // pred_check_branch
          %483 = sbr.rel (%p481) target = $region60
        $region59: #{koelectra_multilabel_forward.1} parent=27 // pred_region
          %s484 = sand.u32 %s28, 1
          %s485 = scalar_lea.sflag [#allocation7], %s484
          %s486 = sand.u32 %s253, 1
          %s487 = smul.addr %s486, 256
          %s488 = scalar_lea.vmem [#allocation8], %s487
          %490 = vsyncadd %s485, 0
          %s491 = smul.addr %s36, 64
          %s492 = smul.addr %s491, 4
          %s493 = scalar_lea.hbm %s8, %s492
          %s494 = sshll.u32 %s493, 4
          %s495 = int_to_ptr.hbm [resolvable:$true] %s494
          %s496 = sshll.u32 %s488, 4
          %s497 = int_to_ptr.vmem [resolvable:$true] %s496
          %502 = dma.hbm_to_vmem [thread:$0]  %s495, 4096, %s497, %s485, 64, 64, 4
        $region60: #{koelectra_multilabel_forward.1} parent=27 // pred_fallthru
          _
        // Predicated region
        $region61: #{koelectra_multilabel_forward.1} parent=27 // pred_check
          %p503 = pneg %p289
        $region62: #{koelectra_multilabel_forward.1} parent=27 // pred_check_branch
          %505 = sbr.rel (%p503) target = $region64
        $region63: #{koelectra_multilabel_forward.1} parent=27 // pred_region
          %p506 = scmp.lt.s32.totalorder %s36, 1
          %s507 = scalar_select %p506, %s36, 1
          %s508 = smul.addr %s507, 8
          %s509 = scalar_lea.vmem %s9, %s508
        $region64: #{koelectra_multilabel_forward.1} parent=27 // pred_fallthru
          _
      $region28: #{koelectra_multilabel_forward.1} parent=5 // pred_fallthru
        _
      %p510 = scmp.le.s32.totalorder 1, %s28
      %p511 = scmp.lt.s32.totalorder %s28, 5
      %p512 = pnand %p510, %p511
      %p513 = pneg %p512
      // Predicated region
      $region65: #{koelectra_multilabel_forward.1} parent=5 // pred_check
        _
      $region66: #{koelectra_multilabel_forward.1} parent=5 // pred_check_branch
        %515 = sbr.rel (%p512) target = $region68
      $region67: #{koelectra_multilabel_forward.1} parent=5 // pred_region
        %s516 = ssub.s32 %s28, 1
        %s517 = sand.u32 %s126, 1
        %s518 = scalar_lea.sflag [#allocation4], %s517
        %s519 = sand.u32 %s126, 1
        %s520 = smul.addr %s519, 192
        %s521 = scalar_lea.vmem [#allocation3], %s520
        // Predicated region
        $region69: #{koelectra_multilabel_forward.1} parent=67 // pred_check
          %p522 = pneg %p139
        $region70: #{koelectra_multilabel_forward.1} parent=67 // pred_check_branch
          %524 = sbr.rel (%p522) target = $region72
        $region71: #{koelectra_multilabel_forward.1} parent=67 // pred_region
          %526 = dma.done %s518, 3072
        $region72: #{koelectra_multilabel_forward.1} parent=67 // pred_fallthru
          _
        %s527 = sand.u32 %s33, 1
        %s528 = scalar_lea.sflag [#allocation7], %s527
        %s529 = sand.u32 %s204, 1
        %s530 = smul.addr %s529, 256
        %s531 = scalar_lea.vmem [#allocation6], %s530
        // Predicated region
        $region73: #{koelectra_multilabel_forward.1} parent=67 // pred_check
          %p532 = pneg %p217
        $region74: #{koelectra_multilabel_forward.1} parent=67 // pred_check_branch
          %534 = sbr.rel (%p532) target = $region76
        $region75: #{koelectra_multilabel_forward.1} parent=67 // pred_region
          %536 = dma.done %s528, 4096
        $region76: #{koelectra_multilabel_forward.1} parent=67 // pred_fallthru
          _
        %s537 = sand.u32 %s33, 1
        %s538 = scalar_lea.sflag [#allocation7], %s537
        %s539 = sand.u32 %s256, 1
        %s540 = smul.addr %s539, 256
        %s541 = scalar_lea.vmem [#allocation8], %s540
        // Predicated region
        $region77: #{koelectra_multilabel_forward.1} parent=67 // pred_check
          %p542 = pneg %p269
        $region78: #{koelectra_multilabel_forward.1} parent=67 // pred_check_branch
          %544 = sbr.rel (%p542) target = $region80
        $region79: #{koelectra_multilabel_forward.1} parent=67 // pred_region
          %546 = dma.done %s538, 4096
        $region80: #{koelectra_multilabel_forward.1} parent=67 // pred_fallthru
          _
        // Predicated region
        $region81: #{koelectra_multilabel_forward.1} parent=67 // pred_check
          %p547 = pneg %p316
        $region82: #{koelectra_multilabel_forward.1} parent=67 // pred_check_branch
          %549 = sbr.rel (%p547) target = $region84
        $region83: #{koelectra_multilabel_forward.1} parent=67 // pred_region
          %551 = dma.done [#allocation10], 1024
        $region84: #{koelectra_multilabel_forward.1} parent=67 // pred_fallthru
          _
        %p552 = scmp.lt.s32.totalorder %s37, 1
        %s553 = scalar_select %p552, %s37, 1
        %s554 = smul.addr %s553, 8
        %s555 = scalar_lea.vmem %s0, %s554
        %p556 = pneg %p66
        %p557 = pneg %p63
        %p558 = scmp.lt.s32.totalorder %s37, 1
        %s559 = scalar_select %p558, %s37, 1
        %s560 = scalar_lea.vmem %s1, %s559
        %p561 = pneg %p92
        %p562 = pneg %p89
        %p563 = pneg %p113
        %p564 = pneg %p110
        %s565 = sand.u32 %s126, 1
        %s566 = scalar_lea.sflag [#allocation4], %s565
        %s567 = sand.u32 %s126, 1
        %s568 = smul.addr %s567, 192
        %s569 = scalar_lea.vmem [#allocation3], %s568
        %p570 = pneg %p139
        %p571 = pneg %p136
        %p572 = scmp.lt.s32.totalorder %s38, 1
        %s573 = scalar_select %p572, %s38, 1
        %s574 = smul.addr %s573, 3
        %s575 = scalar_lea.vmem %s4, %s574
        %p576 = pneg %p165
        %p577 = pneg %p162
        %p578 = scmp.lt.s32.totalorder %s38, 1
        %s579 = scalar_select %p578, %s38, 1
        %s580 = smul.addr %s579, 16
        %s581 = smul.addr %s580, 4
        %s582 = scalar_lea.vmem %s5, %s581
        %p583 = pneg %p191
        %p584 = pneg %p188
        %s585 = sand.u32 %s33, 1
        %s586 = scalar_lea.sflag [#allocation7], %s585
        %s587 = sand.u32 %s204, 1
        %s588 = smul.addr %s587, 256
        %s589 = scalar_lea.vmem [#allocation6], %s588
        %p590 = pneg %p217
        %p591 = pneg %p214
        %p592 = scmp.lt.s32.totalorder %s38, 1
        %s593 = scalar_select %p592, %s38, 1
        %s594 = smul.addr %s593, 4
        %s595 = scalar_lea.vmem %s7, %s594
        %p596 = pneg %p243
        %p597 = pneg %p240
        %s598 = sand.u32 %s33, 1
        %s599 = scalar_lea.sflag [#allocation7], %s598
        %s600 = sand.u32 %s256, 1
        %s601 = smul.addr %s600, 256
        %s602 = scalar_lea.vmem [#allocation8], %s601
        %p603 = pneg %p269
        %p604 = pneg %p266
        %p605 = scmp.lt.s32.totalorder %s38, 1
        %s606 = scalar_select %p605, %s38, 1
        %s607 = smul.addr %s606, 8
        %s608 = scalar_lea.vmem %s9, %s607
        %p609 = pneg %p295
        %p610 = pneg %p292
        %p611 = pneg %p316
        %p612 = pneg %p313
        %p613 = pneg %p337
        %p614 = pneg %p334
        %p615 = pneg %p363
        %p616 = pneg %p360
        %s617 = sand.u32 %s350, 1
        %s618 = scalar_lea.sflag [#allocation5], %s617
        %s619 = sand.u32 %s350, 1
        %s620 = scalar_lea.vmem [#allocation11], %s619
        %p621 = scmp.lt.s32.totalorder %s37, 1
        %s622 = scalar_select %p621, %s37, 1
        %s623 = smul.addr %s622, 8
        %s624 = scalar_lea.vmem %s0, %s623
        %p625 = scmp.lt.s32.totalorder %s37, 1
        %s626 = scalar_select %p625, %s37, 1
        %s627 = scalar_lea.vmem %s1, %s626
        %p628 = scmp.lt.s32.totalorder %s38, 1
        %s629 = scalar_select %p628, %s38, 1
        %s630 = smul.addr %s629, 3
        %s631 = scalar_lea.vmem %s4, %s630
        %p632 = scmp.lt.s32.totalorder %s38, 1
        %s633 = scalar_select %p632, %s38, 1
        %s634 = smul.addr %s633, 16
        %s635 = smul.addr %s634, 4
        %s636 = scalar_lea.vmem %s5, %s635
        %p637 = scmp.lt.s32.totalorder %s38, 1
        %s638 = scalar_select %p637, %s38, 1
        %s639 = smul.addr %s638, 4
        %s640 = scalar_lea.vmem %s7, %s639
        %p641 = scmp.lt.s32.totalorder %s38, 1
        %s642 = scalar_select %p641, %s38, 1
        %s643 = smul.addr %s642, 8
        %s644 = scalar_lea.vmem %s9, %s643
        %p646 = scmp.eq.s32.totalorder %s38, 0
        // Predicated region
        $region85: #{koelectra_multilabel_forward.1} parent=67 // pred_check
          %p647 = pneg %p646
        $region86: #{koelectra_multilabel_forward.1} parent=67 // pred_check_branch
          %649 = sbr.rel (%p647) target = $region88
        $region87: #{koelectra_multilabel_forward.1} parent=67 // pred_region
          %v650 = vld [vmem:[%s624] sm:$0xff]
          %v651 = vld [vmem:[%s2] sm:$0x1]
          %v652 = vld [vmem:[%s2 + $0x1] sm:$0x1]
          %653 = vadd.xlane.f32.xlu0 %v650
          %v654 = vpop.xlane.xlu0 %653
          %v655 = vrcp.pop 128.0
          %v656 = vmul.f32 128.0, %v655
          %v657 = vsub.f32 1.0, %v656
          %v658 = vmul.f32 %v655, %v657
          %v659 = vadd.f32 %v655, %v658
          %vm660 = vweird.f32 %v655
          %v661 = vsel %vm660, %v655, %v659
          %v662 = vmul.f32 %v654, %v661
          %v663 = vsub.f32 %v650, %v662
          %v664 = vmul.f32 %v663, %v663
          %665 = vadd.xlane.f32.xlu0 %v664
          %v666 = vpop.xlane.xlu0 %665
          %v667 = vmul.f32 %v666, %v661
          %v668 = vadd.f32 %v667, 1e-12
          %v669 = vrsqrt.pop %v668
          %v670 = vmul.f32 %v669, %v668
          %v671 = vmul.f32 %v670, %v669
          %v672 = vmul.f32 0.5, %v671
          %v673 = vsub.f32 1.5, %v672
          %v674 = vmul.f32 %v669, %v673
          %vm675 = vweird.f32 %v668
          %vm676 = vweird.f32 %v669
          %vm677 = vmor %vm675, %vm676
          %v678 = vsel %vm677, %v669, %v674
          %v679 = vmul.f32 %v663, %v678
          %v680 = vperm.slane %v651, 0
          %v681 = vmul.f32 %v679, %v680
          %v682 = vperm.slane %v652, 0
          %v683 = vadd.f32 %v681, %v682
          %684 = vst [vmem:[#allocation2] sm:$0xff] %v683
        $region88: #{koelectra_multilabel_forward.1} parent=67 // pred_fallthru
          _
        %v685 = vld [vmem:[#allocation2] sm:$0xff]
        %v686 = vld [vmem:[%s627] sm:$0x1]
        %v687 = vpack.c.bf16 %v685, %v685
        %v688 = vld [vmem:[%s521] sm:$0xff]
        %v689 = vld [vmem:[%s521 + $0x8] sm:$0xf]
        %v690 = vld [vmem:[%s521 + $0xc] sm:$0xff]
        %v691 = vld [vmem:[%s521 + $0x14] sm:$0xf]
        %v692 = vld [vmem:[%s521 + $0x18] sm:$0xff]
        %v693 = vld [vmem:[%s521 + $0x20] sm:$0xf]
        %v694 = vld [vmem:[%s521 + $0x24] sm:$0xff]
        %v695 = vld [vmem:[%s521 + $0x2c] sm:$0xf]
        %v696 = vld [vmem:[%s521 + $0x30] sm:$0xff]
        %v697 = vld [vmem:[%s521 + $0x38] sm:$0xf]
        %v698 = vld [vmem:[%s521 + $0x3c] sm:$0xff]
        %v699 = vld [vmem:[%s521 + $0x44] sm:$0xf]
        %v700 = vld [vmem:[%s521 + $0x48] sm:$0xff]
        %v701 = vld [vmem:[%s521 + $0x50] sm:$0xf]
        %v702 = vld [vmem:[%s521 + $0x54] sm:$0xff]
        %v703 = vld [vmem:[%s521 + $0x5c] sm:$0xf]
        %v704 = vld [vmem:[%s521 + $0x60] sm:$0xff]
        %v705 = vld [vmem:[%s521 + $0x68] sm:$0xf]
        %v706 = vld [vmem:[%s521 + $0x6c] sm:$0xff]
        %v707 = vld [vmem:[%s521 + $0x74] sm:$0xf]
        %v708 = vld [vmem:[%s521 + $0x78] sm:$0xff]
        %v709 = vld [vmem:[%s521 + $0x80] sm:$0xf]
        %v710 = vld [vmem:[%s521 + $0x84] sm:$0xff]
        %v711 = vld [vmem:[%s521 + $0x8c] sm:$0xf]
        %v712 = vld [vmem:[%s521 + $0x90] sm:$0xff]
        %v713 = vld [vmem:[%s521 + $0x98] sm:$0xf]
        %v714 = vld [vmem:[%s521 + $0x9c] sm:$0xff]
        %v715 = vld [vmem:[%s521 + $0xa4] sm:$0xf]
        %v716 = vld [vmem:[%s521 + $0xa8] sm:$0xff]
        %v717 = vld [vmem:[%s521 + $0xb0] sm:$0xf]
        %v718 = vld [vmem:[%s521 + $0xb4] sm:$0xff]
        %v719 = vld [vmem:[%s521 + $0xbc] sm:$0xf]
        %v720 = vld [vmem:[%s631] sm:$0x7]
        %v722 = vperm.slane %v720, 0
        %v723 = vperm.slane %v720, 1
        %v724 = vperm.slane %v720, 2
        %v760 = vunpack.c.l.b16 %v688
        %v761 = vunpack.c.h.b16 %v688
        %v762 = vunpack.c.l.b16 %v689
        %v763 = vunpack.c.l.b16 %v690
        %v764 = vunpack.c.h.b16 %v690
        %v765 = vunpack.c.l.b16 %v691
        %v766 = vunpack.c.l.b16 %v692
        %v767 = vunpack.c.h.b16 %v692
        %v768 = vunpack.c.l.b16 %v693
        %v769 = vunpack.c.l.b16 %v694
        %v770 = vunpack.c.h.b16 %v694
        %v771 = vunpack.c.l.b16 %v695
        %v772 = vunpack.c.l.b16 %v696
        %v773 = vunpack.c.h.b16 %v696
        %v774 = vunpack.c.l.b16 %v697
        %v775 = vunpack.c.l.b16 %v698
        %v776 = vunpack.c.h.b16 %v698
        %v777 = vunpack.c.l.b16 %v699
        %v778 = vunpack.c.l.b16 %v700
        %v779 = vunpack.c.h.b16 %v700
        %v780 = vunpack.c.l.b16 %v701
        %v781 = vunpack.c.l.b16 %v702
        %v782 = vunpack.c.h.b16 %v702
        %v783 = vunpack.c.l.b16 %v703
        %v784 = vunpack.c.l.b16 %v704
        %v785 = vunpack.c.h.b16 %v704
        %v786 = vunpack.c.l.b16 %v705
        %v787 = vunpack.c.l.b16 %v706
        %v788 = vunpack.c.h.b16 %v706
        %v789 = vunpack.c.l.b16 %v707
        %v790 = vunpack.c.l.b16 %v708
        %v791 = vunpack.c.h.b16 %v708
        %v792 = vunpack.c.l.b16 %v709
        %v793 = vunpack.c.l.b16 %v710
        %v794 = vunpack.c.h.b16 %v710
        %v795 = vunpack.c.l.b16 %v711
        %v796 = vunpack.c.l.b16 %v712
        %v797 = vunpack.c.h.b16 %v712
        %v798 = vunpack.c.l.b16 %v713
        %v799 = vunpack.c.l.b16 %v714
        %v800 = vunpack.c.h.b16 %v714
        %v801 = vunpack.c.l.b16 %v715
        %v802 = vunpack.c.l.b16 %v716
        %v803 = vunpack.c.h.b16 %v716
        %v804 = vunpack.c.l.b16 %v717
        %v805 = vunpack.c.l.b16 %v718
        %v806 = vunpack.c.h.b16 %v718
        %v807 = vunpack.c.l.b16 %v719
        %v808 = vpack.c.b16 %v763, %v760
        %v809 = vpack.c.b16 %v764, %v761
        %v810 = vpack.c.b16 %v765, %v762
        %v811 = vpack.c.b16 %v769, %v766
        %v812 = vpack.c.b16 %v770, %v767
        %v813 = vpack.c.b16 %v771, %v768
        %v814 = vpack.c.b16 %v775, %v772
        %v815 = vpack.c.b16 %v776, %v773
        %v816 = vpack.c.b16 %v777, %v774
        %v817 = vpack.c.b16 %v781, %v778
        %v818 = vpack.c.b16 %v782, %v779
        %v819 = vpack.c.b16 %v783, %v780
        %v820 = vpack.c.b16 %v787, %v784
        %v821 = vpack.c.b16 %v788, %v785
        %v822 = vpack.c.b16 %v789, %v786
        %v823 = vpack.c.b16 %v793, %v790
        %v824 = vpack.c.b16 %v794, %v791
        %v825 = vpack.c.b16 %v795, %v792
        %v826 = vpack.c.b16 %v799, %v796
        %v827 = vpack.c.b16 %v800, %v797
        %v828 = vpack.c.b16 %v801, %v798
        %v829 = vpack.c.b16 %v805, %v802
        %v830 = vpack.c.b16 %v806, %v803
        %v831 = vpack.c.b16 %v807, %v804
        %856 = vmatpush.bf16.msra.mxu0 %v829
        %857 = vmatpush.bf16.msra.mxu0 %v826
        %858 = vmatpush.bf16.msra.mxu0 %v823
        %859 = vmatpush.bf16.msra.mxu0 %v820
        %860 = vmatpush.bf16.msra.mxu0 %v817
        %861 = vmatpush.bf16.msra.mxu0 %v814
        %862 = vmatpush.bf16.msra.mxu0 %v811
        %863 = vmatpush.bf16.msra.mxu0 %v808
        %864 = vmatmul.bf16.gmra.mxu0 %v687
        %v865 = vpop.f32.mrf.mxu0
        %v866 = vadd.f32 %v722, %v865
        %v867 = vpop.f32.mrf.mxu0
        %868 = vdwg.mxu0
        %869 = vmatpush.bf16.msra.mxu0 %v830
        %870 = vmatpush.bf16.msra.mxu0 %v827
        %871 = vmatpush.bf16.msra.mxu0 %v824
        %872 = vmatpush.bf16.msra.mxu0 %v821
        %873 = vmatpush.bf16.msra.mxu0 %v818
        %874 = vmatpush.bf16.msra.mxu0 %v815
        %875 = vmatpush.bf16.msra.mxu0 %v812
        %876 = vmatpush.bf16.msra.mxu0 %v809
        %877 = vmatmul.bf16.gmra.mxu0 %v687
        %v878 = vpop.f32.mrf.mxu0
        %v879 = vadd.f32 %v723, %v878
        %v880 = vpop.f32.mrf.mxu0
        %881 = vdwg.mxu0
        %882 = vmatpush.bf16.msra.mxu0 %v831
        %883 = vmatpush.bf16.msra.mxu0 %v828
        %884 = vmatpush.bf16.msra.mxu0 %v825
        %885 = vmatpush.bf16.msra.mxu0 %v822
        %886 = vmatpush.bf16.msra.mxu0 %v819
        %887 = vmatpush.bf16.msra.mxu0 %v816
        %888 = vmatpush.bf16.msra.mxu0 %v813
        %889 = vmatpush.bf16.msra.mxu0 %v810
        %890 = vmatmul.bf16.gmra.mxu0 %v687
        %v891 = vpop.f32.mrf.mxu0
        %v892 = vadd.f32 %v724, %v891
        %v893 = vpop.f32.mrf.mxu0
        %894 = vdwg.mxu0
        %v895 = vpack.c.bf16 %v866, %v866
        %v896 = vpack.c.bf16 %v879, %v879
        %v897 = vpack.c.bf16 %v892, %v892
        %vm898 = vcmask 261120
        %v900 = vsel %vm898, %v895, 0
        %v903 = vsel %vm898, %v896, 0
        %905 = vmatpush.bf16.xpose.msra.mxu0 0
        %906 = vmatpush.bf16.xpose.msra.mxu0 0
        %907 = vmatpush.bf16.xpose.msra.mxu0 0
        %908 = vmatpush.bf16.xpose.msra.mxu0 0
        %909 = vmatpush.bf16.xpose.msra.mxu0 0
        %910 = vmatpush.bf16.xpose.msra.mxu0 0
        %911 = vmatpush.bf16.xpose.msra.mxu0 0
        %912 = vmatpush.bf16.xpose.msra.mxu0 %v903
        %913 = vmatmul.bf16.gmra.mxu0 %v900
        %v914 = vpop.f32.mrf.mxu0
        %v915 = vadd.f32 0.0, %v914
        %v916 = vpop.f32.mrf.mxu0
        %917 = vdwg.mxu0
        %v918 = vmul.f32 %v915, 0.17677669
        %v920 = vperm.slane %v686, 0
        %v922 = vadd.f32 %v918, %v920
        %vm923 = vcmask 64512
        %v924 = vsel %vm923, %v922, -inf
        %925 = vmax.xlane.f32.xlu0 %v924
        %v926 = vpop.xlane.xlu0 %925
        %v927 = vsub.f32 %v922, %v926
        %v928 = vmul.f32 %v927, 1.442695
        %v929 = vpow.pop %v928
        %v930 = vsel %vm923, %v929, 0.0
        %931 = vadd.xlane.f32.xlu0 %v930
        %v932 = vpop.xlane.xlu0 %931
        %v933 = vrcp.pop %v932
        %v934 = vmul.f32 %v929, %v933
        %v935 = vpack.c.bf16 %v934, %v934
        %v937 = vsel %vm923, %v935, 0
        %vm939 = vcmask 1043456
        %v941 = vsel %vm939, %v897, 0
        %943 = vmatpush.bf16.msra.mxu0 0
        %944 = vmatpush.bf16.msra.mxu0 0
        %945 = vmatpush.bf16.msra.mxu0 0
        %946 = vmatpush.bf16.msra.mxu0 0
        %947 = vmatpush.bf16.msra.mxu0 0
        %948 = vmatpush.bf16.msra.mxu0 0
        %949 = vmatpush.bf16.msra.mxu0 0
        %950 = vmatpush.bf16.msra.mxu0 %v941
        %951 = vmatmul.bf16.gmra.mxu0 %v937
        %v952 = vpop.f32.mrf.mxu0
        %v953 = vadd.f32 0.0, %v952
        %v954 = vpop.f32.mrf.mxu0
        %955 = vdwg.mxu0
        %957 = vrot.lane.b32.xlu0 %v895, 96
        %v958 = vpop.permute.xlu0 %957
        %960 = vrot.lane.b32.xlu0 %v896, 96
        %v961 = vpop.permute.xlu0 %960
        %v963 = vsel %vm898, %v958, 0
        %v966 = vsel %vm898, %v961, 0
        %968 = vmatpush.bf16.xpose.msra.mxu0 0
        %969 = vmatpush.bf16.xpose.msra.mxu0 0
        %970 = vmatpush.bf16.xpose.msra.mxu0 0
        %971 = vmatpush.bf16.xpose.msra.mxu0 0
        %972 = vmatpush.bf16.xpose.msra.mxu0 0
        %973 = vmatpush.bf16.xpose.msra.mxu0 0
        %974 = vmatpush.bf16.xpose.msra.mxu0 0
        %975 = vmatpush.bf16.xpose.msra.mxu0 %v966
        %976 = vmatmul.bf16.gmra.mxu0 %v963
        %v977 = vpop.f32.mrf.mxu0
        %v978 = vadd.f32 0.0, %v977
        %v979 = vpop.f32.mrf.mxu0
        %980 = vdwg.mxu0
        %v981 = vmul.f32 %v978, 0.17677669
        %v982 = vadd.f32 %v981, %v920
        %v983 = vsel %vm923, %v982, -inf
        %984 = vmax.xlane.f32.xlu0 %v983
        %v985 = vpop.xlane.xlu0 %984
        %v986 = vsub.f32 %v982, %v985
        %v987 = vmul.f32 %v986, 1.442695
        %v988 = vpow.pop %v987
        %v989 = vsel %vm923, %v988, 0.0
        %990 = vadd.xlane.f32.xlu0 %v989
        %v991 = vpop.xlane.xlu0 %990
        %v992 = vrcp.pop %v991
        %v993 = vmul.f32 %v988, %v992
        %v994 = vpack.c.bf16 %v993, %v993
        %996 = vrot.lane.b32.xlu0 %v897, 96
        %v997 = vpop.permute.xlu0 %996
        %v999 = vsel %vm923, %v994, 0
        %v1002 = vsel %vm939, %v997, 0
        %1004 = vmatpush.bf16.msra.mxu0 0
        %1005 = vmatpush.bf16.msra.mxu0 0
        %1006 = vmatpush.bf16.msra.mxu0 0
        %1007 = vmatpush.bf16.msra.mxu0 0
        %1008 = vmatpush.bf16.msra.mxu0 0
        %1009 = vmatpush.bf16.msra.mxu0 0
        %1010 = vmatpush.bf16.msra.mxu0 0
        %1011 = vmatpush.bf16.msra.mxu0 %v1002
        %1012 = vmatmul.bf16.gmra.mxu0 %v999
        %v1013 = vpop.f32.mrf.mxu0
        %v1014 = vadd.f32 0.0, %v1013
        %v1015 = vpop.f32.mrf.mxu0
        %1016 = vdwg.mxu0
        %1017 = vrot.lane.b32.xlu0 %v895, 64
        %v1018 = vpop.permute.xlu0 %1017
        %1019 = vrot.lane.b32.xlu0 %v896, 64
        %v1020 = vpop.permute.xlu0 %1019
        %v1022 = vsel %vm898, %v1018, 0
        %v1025 = vsel %vm898, %v1020, 0
        %1027 = vmatpush.bf16.xpose.msra.mxu0 0
        %1028 = vmatpush.bf16.xpose.msra.mxu0 0
        %1029 = vmatpush.bf16.xpose.msra.mxu0 0
        %1030 = vmatpush.bf16.xpose.msra.mxu0 0
        %1031 = vmatpush.bf16.xpose.msra.mxu0 0
        %1032 = vmatpush.bf16.xpose.msra.mxu0 0
        %1033 = vmatpush.bf16.xpose.msra.mxu0 0
        %1034 = vmatpush.bf16.xpose.msra.mxu0 %v1025
        %1035 = vmatmul.bf16.gmra.mxu0 %v1022
        %v1036 = vpop.f32.mrf.mxu0
        %v1037 = vadd.f32 0.0, %v1036
        %v1038 = vpop.f32.mrf.mxu0
        %1039 = vdwg.mxu0
        %v1040 = vmul.f32 %v1037, 0.17677669
        %v1041 = vadd.f32 %v1040, %v920
        %v1042 = vsel %vm923, %v1041, -inf
        %1043 = vmax.xlane.f32.xlu0 %v1042
        %v1044 = vpop.xlane.xlu0 %1043
        %v1045 = vsub.f32 %v1041, %v1044
        %v1046 = vmul.f32 %v1045, 1.442695
        %v1047 = vpow.pop %v1046
        %v1048 = vsel %vm923, %v1047, 0.0
        %1049 = vadd.xlane.f32.xlu0 %v1048
        %v1050 = vpop.xlane.xlu0 %1049
        %v1051 = vrcp.pop %v1050
        %v1052 = vmul.f32 %v1047, %v1051
        %v1053 = vpack.c.bf16 %v1052, %v1052
        %1054 = vrot.lane.b32.xlu0 %v897, 64
        %v1055 = vpop.permute.xlu0 %1054
        %v1057 = vsel %vm923, %v1053, 0
        %v1060 = vsel %vm939, %v1055, 0
        %1062 = vmatpush.bf16.msra.mxu0 0
        %1063 = vmatpush.bf16.msra.mxu0 0
        %1064 = vmatpush.bf16.msra.mxu0 0
        %1065 = vmatpush.bf16.msra.mxu0 0
        %1066 = vmatpush.bf16.msra.mxu0 0
        %1067 = vmatpush.bf16.msra.mxu0 0
        %1068 = vmatpush.bf16.msra.mxu0 0
        %1069 = vmatpush.bf16.msra.mxu0 %v1060
        %1070 = vmatmul.bf16.gmra.mxu0 %v1057
        %v1071 = vpop.f32.mrf.mxu0
        %v1072 = vadd.f32 0.0, %v1071
        %v1073 = vpop.f32.mrf.mxu0
        %1074 = vdwg.mxu0
        %1075 = vrot.lane.b32.xlu0 %v895, 32
        %v1076 = vpop.permute.xlu0 %1075
        %1077 = vrot.lane.b32.xlu0 %v896, 32
        %v1078 = vpop.permute.xlu0 %1077
        %v1080 = vsel %vm898, %v1076, 0
        %v1083 = vsel %vm898, %v1078, 0
        %1085 = vmatpush.bf16.xpose.msra.mxu0 0
        %1086 = vmatpush.bf16.xpose.msra.mxu0 0
        %1087 = vmatpush.bf16.xpose.msra.mxu0 0
        %1088 = vmatpush.bf16.xpose.msra.mxu0 0
        %1089 = vmatpush.bf16.xpose.msra.mxu0 0
        %1090 = vmatpush.bf16.xpose.msra.mxu0 0
        %1091 = vmatpush.bf16.xpose.msra.mxu0 0
        %1092 = vmatpush.bf16.xpose.msra.mxu0 %v1083
        %1093 = vmatmul.bf16.gmra.mxu0 %v1080
        %v1094 = vpop.f32.mrf.mxu0
        %v1095 = vadd.f32 0.0, %v1094
        %v1096 = vpop.f32.mrf.mxu0
        %1097 = vdwg.mxu0
        %v1098 = vmul.f32 %v1095, 0.17677669
        %v1099 = vadd.f32 %v1098, %v920
        %v1100 = vsel %vm923, %v1099, -inf
        %1101 = vmax.xlane.f32.xlu0 %v1100
        %v1102 = vpop.xlane.xlu0 %1101
        %v1103 = vsub.f32 %v1099, %v1102
        %v1104 = vmul.f32 %v1103, 1.442695
        %v1105 = vpow.pop %v1104
        %v1106 = vsel %vm923, %v1105, 0.0
        %1107 = vadd.xlane.f32.xlu0 %v1106
        %v1108 = vpop.xlane.xlu0 %1107
        %v1109 = vrcp.pop %v1108
        %v1110 = vmul.f32 %v1105, %v1109
        %v1111 = vpack.c.bf16 %v1110, %v1110
        %1112 = vrot.lane.b32.xlu0 %v897, 32
        %v1113 = vpop.permute.xlu0 %1112
        %v1115 = vsel %vm923, %v1111, 0
        %v1118 = vsel %vm939, %v1113, 0
        %1120 = vmatpush.bf16.msra.mxu0 0
        %1121 = vmatpush.bf16.msra.mxu0 0
        %1122 = vmatpush.bf16.msra.mxu0 0
        %1123 = vmatpush.bf16.msra.mxu0 0
        %1124 = vmatpush.bf16.msra.mxu0 0
        %1125 = vmatpush.bf16.msra.mxu0 0
        %1126 = vmatpush.bf16.msra.mxu0 0
        %1127 = vmatpush.bf16.msra.mxu0 %v1118
        %1128 = vmatmul.bf16.gmra.mxu0 %v1115
        %v1129 = vpop.f32.mrf.mxu0
        %v1130 = vadd.f32 0.0, %v1129
        %v1131 = vpop.f32.mrf.mxu0
        %1132 = vdwg.mxu0
        %1134 = vrot.lane.b32.xlu0 %v1014, 32
        %v1135 = vpop.permute.xlu0 %1134
        %1138 = vrot.lane.b32.xlu0 %v1072, 64
        %v1139 = vpop.permute.xlu0 %1138
        %1142 = vrot.lane.b32.xlu0 %v1130, 96
        %v1143 = vpop.permute.xlu0 %1142
        %v1145 = vsel %vm898, %v953, %v1135
        %vm1146 = vcmask 523264
        %v1147 = vsel %vm1146, %v1145, %v1139
        %vm1148 = vcmask 785408
        %v1149 = vsel %vm1148, %v1147, %v1143
        %v1150 = vld [vmem:[%s644] sm:$0x3f]
        %v1151 = vpack.c.bf16 %v1149, %v1149
        %v1152 = vld [vmem:[%s636] sm:$0xf]
        %v1153 = vld [vmem:[%s636 + $0x4] sm:$0xf]
        %v1154 = vld [vmem:[%s636 + $0x8] sm:$0xf]
        %v1155 = vld [vmem:[%s636 + $0xc] sm:$0xf]
        %v1156 = vld [vmem:[%s636 + $0x10] sm:$0xf]
        %v1157 = vld [vmem:[%s636 + $0x14] sm:$0xf]
        %v1158 = vld [vmem:[%s636 + $0x18] sm:$0xf]
        %v1159 = vld [vmem:[%s636 + $0x1c] sm:$0xf]
        %v1160 = vld [vmem:[%s636 + $0x20] sm:$0xf]
        %v1161 = vld [vmem:[%s636 + $0x24] sm:$0xf]
        %v1162 = vld [vmem:[%s636 + $0x28] sm:$0xf]
        %v1163 = vld [vmem:[%s636 + $0x2c] sm:$0xf]
        %v1164 = vld [vmem:[%s636 + $0x30] sm:$0xf]
        %v1165 = vld [vmem:[%s636 + $0x34] sm:$0xf]
        %v1166 = vld [vmem:[%s636 + $0x38] sm:$0xf]
        %v1167 = vld [vmem:[%s636 + $0x3c] sm:$0xf]
        %v1168 = vperm.slane %v1150, 0
        %v1185 = vunpack.c.l.b16 %v1152
        %v1186 = vunpack.c.l.b16 %v1153
        %v1187 = vunpack.c.l.b16 %v1154
        %v1188 = vunpack.c.l.b16 %v1155
        %v1189 = vunpack.c.l.b16 %v1156
        %v1190 = vunpack.c.l.b16 %v1157
        %v1191 = vunpack.c.l.b16 %v1158
        %v1192 = vunpack.c.l.b16 %v1159
        %v1193 = vunpack.c.l.b16 %v1160
        %v1194 = vunpack.c.l.b16 %v1161
        %v1195 = vunpack.c.l.b16 %v1162
        %v1196 = vunpack.c.l.b16 %v1163
        %v1197 = vunpack.c.l.b16 %v1164
        %v1198 = vunpack.c.l.b16 %v1165
        %v1199 = vunpack.c.l.b16 %v1166
        %v1200 = vunpack.c.l.b16 %v1167
        %v1201 = vpack.c.b16 %v1186, %v1185
        %v1202 = vpack.c.b16 %v1188, %v1187
        %v1203 = vpack.c.b16 %v1190, %v1189
        %v1204 = vpack.c.b16 %v1192, %v1191
        %v1205 = vpack.c.b16 %v1194, %v1193
        %v1206 = vpack.c.b16 %v1196, %v1195
        %v1207 = vpack.c.b16 %v1198, %v1197
        %v1208 = vpack.c.b16 %v1200, %v1199
        %1217 = vmatpush.bf16.msra.mxu0 %v1208
        %1218 = vmatpush.bf16.msra.mxu0 %v1207
        %1219 = vmatpush.bf16.msra.mxu0 %v1206
        %1220 = vmatpush.bf16.msra.mxu0 %v1205
        %1221 = vmatpush.bf16.msra.mxu0 %v1204
        %1222 = vmatpush.bf16.msra.mxu0 %v1203
        %1223 = vmatpush.bf16.msra.mxu0 %v1202
        %1224 = vmatpush.bf16.msra.mxu0 %v1201
        %1225 = vmatmul.bf16.gmra.mxu0 %v1151
        %v1226 = vpop.f32.mrf.mxu0
        %v1227 = vadd.f32 %v1168, %v1226
        %v1228 = vpop.f32.mrf.mxu0
        %1229 = vdwg.mxu0
        %v1230 = vadd.f32 %v685, %v1227
        %1231 = vadd.xlane.f32.xlu0 %v1230
        %v1232 = vpop.xlane.xlu0 %1231
        %v1233 = vrcp.pop 128.0
        %v1234 = vmul.f32 128.0, %v1233
        %v1235 = vsub.f32 1.0, %v1234
        %v1236 = vmul.f32 %v1233, %v1235
        %v1237 = vadd.f32 %v1233, %v1236
        %vm1238 = vweird.f32 %v1233
        %v1239 = vsel %vm1238, %v1233, %v1237
        %v1240 = vmul.f32 %v1232, %v1239
        %v1241 = vsub.f32 %v1230, %v1240
        %v1242 = vmul.f32 %v1241, %v1241
        %1243 = vadd.xlane.f32.xlu0 %v1242
        %v1244 = vpop.xlane.xlu0 %1243
        %v1245 = vmul.f32 %v1244, %v1239
        %v1246 = vadd.f32 %v1245, 1e-12
        %v1247 = vrsqrt.pop %v1246
        %v1248 = vmul.f32 %v1247, %v1246
        %v1249 = vmul.f32 %v1248, %v1247
        %v1250 = vmul.f32 0.5, %v1249
        %v1251 = vsub.f32 1.5, %v1250
        %v1252 = vmul.f32 %v1247, %v1251
        %vm1253 = vweird.f32 %v1246
        %vm1254 = vweird.f32 %v1247
        %vm1255 = vmor %vm1253, %vm1254
        %v1256 = vsel %vm1255, %v1247, %v1252
        %v1257 = vmul.f32 %v1241, %v1256
        %v1258 = vperm.slane %v1150, 1
        %v1259 = vmul.f32 %v1257, %v1258
        %v1260 = vperm.slane %v1150, 2
        %v1261 = vadd.f32 %v1259, %v1260
        %v1262 = vpack.c.bf16 %v1261, %v1261
        %v1263 = vld [vmem:[%s531] sm:$0xff]
        %v1264 = vld [vmem:[%s531 + $0x8] sm:$0xff]
        %v1265 = vld [vmem:[%s531 + $0x10] sm:$0xff]
        %v1266 = vld [vmem:[%s531 + $0x18] sm:$0xff]
        %v1267 = vld [vmem:[%s531 + $0x20] sm:$0xff]
        %v1268 = vld [vmem:[%s531 + $0x28] sm:$0xff]
        %v1269 = vld [vmem:[%s531 + $0x30] sm:$0xff]
        %v1270 = vld [vmem:[%s531 + $0x38] sm:$0xff]
        %v1271 = vld [vmem:[%s531 + $0x40] sm:$0xff]
        %v1272 = vld [vmem:[%s531 + $0x48] sm:$0xff]
        %v1273 = vld [vmem:[%s531 + $0x50] sm:$0xff]
        %v1274 = vld [vmem:[%s531 + $0x58] sm:$0xff]
        %v1275 = vld [vmem:[%s531 + $0x60] sm:$0xff]
        %v1276 = vld [vmem:[%s531 + $0x68] sm:$0xff]
        %v1277 = vld [vmem:[%s531 + $0x70] sm:$0xff]
        %v1278 = vld [vmem:[%s531 + $0x78] sm:$0xff]
        %v1279 = vld [vmem:[%s531 + $0x80] sm:$0xff]
        %v1280 = vld [vmem:[%s531 + $0x88] sm:$0xff]
        %v1281 = vld [vmem:[%s531 + $0x90] sm:$0xff]
        %v1282 = vld [vmem:[%s531 + $0x98] sm:$0xff]
        %v1283 = vld [vmem:[%s531 + $0xa0] sm:$0xff]
        %v1284 = vld [vmem:[%s531 + $0xa8] sm:$0xff]
        %v1285 = vld [vmem:[%s531 + $0xb0] sm:$0xff]
        %v1286 = vld [vmem:[%s531 + $0xb8] sm:$0xff]
        %v1287 = vld [vmem:[%s531 + $0xc0] sm:$0xff]
        %v1288 = vld [vmem:[%s531 + $0xc8] sm:$0xff]
        %v1289 = vld [vmem:[%s531 + $0xd0] sm:$0xff]
        %v1290 = vld [vmem:[%s531 + $0xd8] sm:$0xff]
        %v1291 = vld [vmem:[%s531 + $0xe0] sm:$0xff]
        %v1292 = vld [vmem:[%s531 + $0xe8] sm:$0xff]
        %v1293 = vld [vmem:[%s531 + $0xf0] sm:$0xff]
        %v1294 = vld [vmem:[%s531 + $0xf8] sm:$0xff]
        %v1295 = vld [vmem:[%s640] sm:$0xf]
        %v1297 = vperm.slane %v1295, 0
        %v1298 = vperm.slane %v1295, 1
        %v1299 = vperm.slane %v1295, 2
        %v1300 = vperm.slane %v1295, 3
        %v1337 = vunpack.c.l.b16 %v1263
        %v1338 = vunpack.c.h.b16 %v1263
        %v1339 = vunpack.c.l.b16 %v1264
        %v1340 = vunpack.c.h.b16 %v1264
        %v1341 = vunpack.c.l.b16 %v1265
        %v1342 = vunpack.c.h.b16 %v1265
        %v1343 = vunpack.c.l.b16 %v1266
        %v1344 = vunpack.c.h.b16 %v1266
        %v1345 = vunpack.c.l.b16 %v1267
        %v1346 = vunpack.c.h.b16 %v1267
        %v1347 = vunpack.c.l.b16 %v1268
        %v1348 = vunpack.c.h.b16 %v1268
        %v1349 = vunpack.c.l.b16 %v1269
        %v1350 = vunpack.c.h.b16 %v1269
        %v1351 = vunpack.c.l.b16 %v1270
        %v1352 = vunpack.c.h.b16 %v1270
        %v1353 = vunpack.c.l.b16 %v1271
        %v1354 = vunpack.c.h.b16 %v1271
        %v1355 = vunpack.c.l.b16 %v1272
        %v1356 = vunpack.c.h.b16 %v1272
        %v1357 = vunpack.c.l.b16 %v1273
        %v1358 = vunpack.c.h.b16 %v1273
        %v1359 = vunpack.c.l.b16 %v1274
        %v1360 = vunpack.c.h.b16 %v1274
        %v1361 = vunpack.c.l.b16 %v1275
        %v1362 = vunpack.c.h.b16 %v1275
        %v1363 = vunpack.c.l.b16 %v1276
        %v1364 = vunpack.c.h.b16 %v1276
        %v1365 = vunpack.c.l.b16 %v1277
        %v1366 = vunpack.c.h.b16 %v1277
        %v1367 = vunpack.c.l.b16 %v1278
        %v1368 = vunpack.c.h.b16 %v1278
        %v1369 = vunpack.c.l.b16 %v1279
        %v1370 = vunpack.c.h.b16 %v1279
        %v1371 = vunpack.c.l.b16 %v1280
        %v1372 = vunpack.c.h.b16 %v1280
        %v1373 = vunpack.c.l.b16 %v1281
        %v1374 = vunpack.c.h.b16 %v1281
        %v1375 = vunpack.c.l.b16 %v1282
        %v1376 = vunpack.c.h.b16 %v1282
        %v1377 = vunpack.c.l.b16 %v1283
        %v1378 = vunpack.c.h.b16 %v1283
        %v1379 = vunpack.c.l.b16 %v1284
        %v1380 = vunpack.c.h.b16 %v1284
        %v1381 = vunpack.c.l.b16 %v1285
        %v1382 = vunpack.c.h.b16 %v1285
        %v1383 = vunpack.c.l.b16 %v1286
        %v1384 = vunpack.c.h.b16 %v1286
        %v1385 = vunpack.c.l.b16 %v1287
        %v1386 = vunpack.c.h.b16 %v1287
        %v1387 = vunpack.c.l.b16 %v1288
        %v1388 = vunpack.c.h.b16 %v1288
        %v1389 = vunpack.c.l.b16 %v1289
        %v1390 = vunpack.c.h.b16 %v1289
        %v1391 = vunpack.c.l.b16 %v1290
        %v1392 = vunpack.c.h.b16 %v1290
        %v1393 = vunpack.c.l.b16 %v1291
        %v1394 = vunpack.c.h.b16 %v1291
        %v1395 = vunpack.c.l.b16 %v1292
        %v1396 = vunpack.c.h.b16 %v1292
        %v1397 = vunpack.c.l.b16 %v1293
        %v1398 = vunpack.c.h.b16 %v1293
        %v1399 = vunpack.c.l.b16 %v1294
        %v1400 = vunpack.c.h.b16 %v1294
        %v1401 = vpack.c.b16 %v1341, %v1337
        %v1402 = vpack.c.b16 %v1342, %v1338
        %v1403 = vpack.c.b16 %v1343, %v1339
        %v1404 = vpack.c.b16 %v1344, %v1340
        %v1405 = vpack.c.b16 %v1349, %v1345
        %v1406 = vpack.c.b16 %v1350, %v1346
        %v1407 = vpack.c.b16 %v1351, %v1347
        %v1408 = vpack.c.b16 %v1352, %v1348
        %v1409 = vpack.c.b16 %v1357, %v1353
        %v1410 = vpack.c.b16 %v1358, %v1354
        %v1411 = vpack.c.b16 %v1359, %v1355
        %v1412 = vpack.c.b16 %v1360, %v1356
        %v1413 = vpack.c.b16 %v1365, %v1361
        %v1414 = vpack.c.b16 %v1366, %v1362
        %v1415 = vpack.c.b16 %v1367, %v1363
        %v1416 = vpack.c.b16 %v1368, %v1364
        %v1417 = vpack.c.b16 %v1373, %v1369
        %v1418 = vpack.c.b16 %v1374, %v1370
        %v1419 = vpack.c.b16 %v1375, %v1371
        %v1420 = vpack.c.b16 %v1376, %v1372
        %v1421 = vpack.c.b16 %v1381, %v1377
        %v1422 = vpack.c.b16 %v1382, %v1378
        %v1423 = vpack.c.b16 %v1383, %v1379
        %v1424 = vpack.c.b16 %v1384, %v1380
        %v1425 = vpack.c.b16 %v1389, %v1385
        %v1426 = vpack.c.b16 %v1390, %v1386
        %v1427 = vpack.c.b16 %v1391, %v1387
        %v1428 = vpack.c.b16 %v1392, %v1388
        %v1429 = vpack.c.b16 %v1397, %v1393
        %v1430 = vpack.c.b16 %v1398, %v1394
        %v1431 = vpack.c.b16 %v1399, %v1395
        %v1432 = vpack.c.b16 %v1400, %v1396
        %1465 = vmatpush.bf16.msra.mxu0 %v1429
        %1466 = vmatpush.bf16.msra.mxu0 %v1425
        %1467 = vmatpush.bf16.msra.mxu0 %v1421
        %1468 = vmatpush.bf16.msra.mxu0 %v1417
        %1469 = vmatpush.bf16.msra.mxu0 %v1413
        %1470 = vmatpush.bf16.msra.mxu0 %v1409
        %1471 = vmatpush.bf16.msra.mxu0 %v1405
        %1472 = vmatpush.bf16.msra.mxu0 %v1401
        %1473 = vmatmul.bf16.gmra.mxu0 %v1262
        %v1474 = vpop.f32.mrf.mxu0
        %v1475 = vadd.f32 %v1297, %v1474
        %v1476 = vpop.f32.mrf.mxu0
        %1477 = vdwg.mxu0
        %1478 = vmatpush.bf16.msra.mxu0 %v1430
        %1479 = vmatpush.bf16.msra.mxu0 %v1426
        %1480 = vmatpush.bf16.msra.mxu0 %v1422
        %1481 = vmatpush.bf16.msra.mxu0 %v1418
        %1482 = vmatpush.bf16.msra.mxu0 %v1414
        %1483 = vmatpush.bf16.msra.mxu0 %v1410
        %1484 = vmatpush.bf16.msra.mxu0 %v1406
        %1485 = vmatpush.bf16.msra.mxu0 %v1402
        %1486 = vmatmul.bf16.gmra.mxu0 %v1262
        %v1487 = vpop.f32.mrf.mxu0
        %v1488 = vadd.f32 %v1298, %v1487
        %v1489 = vpop.f32.mrf.mxu0
        %1490 = vdwg.mxu0
        %1491 = vmatpush.bf16.msra.mxu0 %v1431
        %1492 = vmatpush.bf16.msra.mxu0 %v1427
        %1493 = vmatpush.bf16.msra.mxu0 %v1423
        %1494 = vmatpush.bf16.msra.mxu0 %v1419
        %1495 = vmatpush.bf16.msra.mxu0 %v1415
        %1496 = vmatpush.bf16.msra.mxu0 %v1411
        %1497 = vmatpush.bf16.msra.mxu0 %v1407
        %1498 = vmatpush.bf16.msra.mxu0 %v1403
        %1499 = vmatmul.bf16.gmra.mxu0 %v1262
        %v1500 = vpop.f32.mrf.mxu0
        %v1501 = vadd.f32 %v1299, %v1500
        %v1502 = vpop.f32.mrf.mxu0
        %1503 = vdwg.mxu0
        %1504 = vmatpush.bf16.msra.mxu0 %v1432
        %1505 = vmatpush.bf16.msra.mxu0 %v1428
        %1506 = vmatpush.bf16.msra.mxu0 %v1424
        %1507 = vmatpush.bf16.msra.mxu0 %v1420
        %1508 = vmatpush.bf16.msra.mxu0 %v1416
        %1509 = vmatpush.bf16.msra.mxu0 %v1412
        %1510 = vmatpush.bf16.msra.mxu0 %v1408
        %1511 = vmatpush.bf16.msra.mxu0 %v1404
        %1512 = vmatmul.bf16.gmra.mxu0 %v1262
        %v1513 = vpop.f32.mrf.mxu0
        %v1514 = vadd.f32 %v1300, %v1513
        %v1515 = vpop.f32.mrf.mxu0
        %1516 = vdwg.mxu0
        %v1517 = vmul.f32 %v1475, 0.5
        %v1518 = vmul.f32 %v1488, 0.5
        %v1519 = vmul.f32 %v1501, 0.5
        %v1520 = vmul.f32 %v1514, 0.5
        %v1521 = vmul.f32 %v1475, 0.70710677
        %v1522 = vmul.f32 %v1488, 0.70710677
        %v1523 = vmul.f32 %v1501, 0.70710677
        %v1524 = vmul.f32 %v1514, 0.70710677
        %v1525 = vand.u32 2147483647, %v1521
        %v1526 = vand.u32 2147483647, %v1522
        %v1527 = vand.u32 2147483647, %v1523
        %v1528 = vand.u32 2147483647, %v1524
        %v1529 = vmul.f32 %v1525, 0.3275911
        %v1530 = vmul.f32 %v1526, 0.3275911
        %v1531 = vmul.f32 %v1527, 0.3275911
        %v1532 = vmul.f32 %v1528, 0.3275911
        %v1533 = vadd.f32 %v1529, 1.0
        %v1534 = vadd.f32 %v1530, 1.0
        %v1535 = vadd.f32 %v1531, 1.0
        %v1536 = vadd.f32 %v1532, 1.0
        %v1537 = vrcp.pop %v1533
        %v1538 = vrcp.pop %v1534
        %v1539 = vrcp.pop %v1535
        %v1540 = vrcp.pop %v1536
        %v1541 = vmul.f32 %v1537, 1.0614054
        %v1542 = vmul.f32 %v1538, 1.0614054
        %v1543 = vmul.f32 %v1539, 1.0614054
        %v1544 = vmul.f32 %v1540, 1.0614054
        %v1545 = vadd.f32 %v1541, -1.4531521
        %v1546 = vadd.f32 %v1542, -1.4531521
        %v1547 = vadd.f32 %v1543, -1.4531521
        %v1548 = vadd.f32 %v1544, -1.4531521
        %v1549 = vmul.f32 %v1537, %v1545
        %v1550 = vmul.f32 %v1538, %v1546
        %v1551 = vmul.f32 %v1539, %v1547
        %v1552 = vmul.f32 %v1540, %v1548
        %v1553 = vadd.f32 %v1549, 1.4214138
        %v1554 = vadd.f32 %v1550, 1.4214138
        %v1555 = vadd.f32 %v1551, 1.4214138
        %v1556 = vadd.f32 %v1552, 1.4214138
        %v1557 = vmul.f32 %v1537, %v1553
        %v1558 = vmul.f32 %v1538, %v1554
        %v1559 = vmul.f32 %v1539, %v1555
        %v1560 = vmul.f32 %v1540, %v1556
        %v1561 = vadd.f32 %v1557, -0.28449672
        %v1562 = vadd.f32 %v1558, -0.28449672
        %v1563 = vadd.f32 %v1559, -0.28449672
        %v1564 = vadd.f32 %v1560, -0.28449672
        %v1565 = vmul.f32 %v1537, %v1561
        %v1566 = vmul.f32 %v1538, %v1562
        %v1567 = vmul.f32 %v1539, %v1563
        %v1568 = vmul.f32 %v1540, %v1564
        %v1569 = vadd.f32 %v1565, 0.2548296
        %v1570 = vadd.f32 %v1566, 0.2548296
        %v1571 = vadd.f32 %v1567, 0.2548296
        %v1572 = vadd.f32 %v1568, 0.2548296
        %v1573 = vmul.f32 %v1537, %v1569
        %v1574 = vmul.f32 %v1538, %v1570
        %v1575 = vmul.f32 %v1539, %v1571
        %v1576 = vmul.f32 %v1540, %v1572
        %v1577 = vsub.f32 0.0, %v1525
        %v1578 = vsub.f32 0.0, %v1526
        %v1579 = vsub.f32 0.0, %v1527
        %v1580 = vsub.f32 0.0, %v1528
        %v1581 = vmul.f32 %v1577, %v1525
        %v1582 = vmul.f32 %v1578, %v1526
        %v1583 = vmul.f32 %v1579, %v1527
        %v1584 = vmul.f32 %v1580, %v1528
        %v1585 = vmul.f32 %v1581, 1.442695
        %v1586 = vpow.pop %v1585
        %v1587 = vmul.f32 %v1582, 1.442695
        %v1588 = vpow.pop %v1587
        %v1589 = vmul.f32 %v1583, 1.442695
        %v1590 = vpow.pop %v1589
        %v1591 = vmul.f32 %v1584, 1.442695
        %v1592 = vpow.pop %v1591
        %v1593 = vmul.f32 %v1573, %v1586
        %v1594 = vmul.f32 %v1574, %v1588
        %v1595 = vmul.f32 %v1575, %v1590
        %v1596 = vmul.f32 %v1576, %v1592
        %v1597 = vsub.f32 1.0, %v1593
        %v1598 = vsub.f32 1.0, %v1594
        %v1599 = vsub.f32 1.0, %v1595
        %v1600 = vsub.f32 1.0, %v1596
        %vm1601 = vcmp.ge.f32.partialorder %v1521, 0.0
        %vm1602 = vcmp.ge.f32.partialorder %v1522, 0.0
        %vm1603 = vcmp.ge.f32.partialorder %v1523, 0.0
        %vm1604 = vcmp.ge.f32.partialorder %v1524, 0.0
        %v1605 = vsub.f32 0.0, %v1597
        %v1606 = vsub.f32 0.0, %v1598
        %v1607 = vsub.f32 0.0, %v1599
        %v1608 = vsub.f32 0.0, %v1600
        %v1609 = vsel %vm1601, %v1597, %v1605
        %v1610 = vsel %vm1602, %v1598, %v1606
        %v1611 = vsel %vm1603, %v1599, %v1607
        %v1612 = vsel %vm1604, %v1600, %v1608
        %v1613 = vadd.f32 %v1609, 1.0
        %v1614 = vadd.f32 %v1610, 1.0
        %v1615 = vadd.f32 %v1611, 1.0
        %v1616 = vadd.f32 %v1612, 1.0
        %v1617 = vmul.f32 %v1517, %v1613
        %v1618 = vmul.f32 %v1518, %v1614
        %v1619 = vmul.f32 %v1519, %v1615
        %v1620 = vmul.f32 %v1520, %v1616
        %v1621 = vpack.c.bf16 %v1617, %v1617
        %v1622 = vpack.c.bf16 %v1618, %v1618
        %v1623 = vpack.c.bf16 %v1619, %v1619
        %v1624 = vpack.c.bf16 %v1620, %v1620
        %v1625 = vld [vmem:[%s541] sm:$0xf]
        %v1626 = vld [vmem:[%s541 + $0x4] sm:$0xf]
        %v1627 = vld [vmem:[%s541 + $0x8] sm:$0xf]
        %v1628 = vld [vmem:[%s541 + $0xc] sm:$0xf]
        %v1629 = vld [vmem:[%s541 + $0x10] sm:$0xf]
        %v1630 = vld [vmem:[%s541 + $0x14] sm:$0xf]
        %v1631 = vld [vmem:[%s541 + $0x18] sm:$0xf]
        %v1632 = vld [vmem:[%s541 + $0x1c] sm:$0xf]
        %v1633 = vld [vmem:[%s541 + $0x20] sm:$0xf]
        %v1634 = vld [vmem:[%s541 + $0x24] sm:$0xf]
        %v1635 = vld [vmem:[%s541 + $0x28] sm:$0xf]
        %v1636 = vld [vmem:[%s541 + $0x2c] sm:$0xf]
        %v1637 = vld [vmem:[%s541 + $0x30] sm:$0xf]
        %v1638 = vld [vmem:[%s541 + $0x34] sm:$0xf]
        %v1639 = vld [vmem:[%s541 + $0x38] sm:$0xf]
        %v1640 = vld [vmem:[%s541 + $0x3c] sm:$0xf]
        %v1641 = vld [vmem:[%s541 + $0x40] sm:$0xf]
        %v1642 = vld [vmem:[%s541 + $0x44] sm:$0xf]
        %v1643 = vld [vmem:[%s541 + $0x48] sm:$0xf]
        %v1644 = vld [vmem:[%s541 + $0x4c] sm:$0xf]
        %v1645 = vld [vmem:[%s541 + $0x50] sm:$0xf]
        %v1646 = vld [vmem:[%s541 + $0x54] sm:$0xf]
        %v1647 = vld [vmem:[%s541 + $0x58] sm:$0xf]
        %v1648 = vld [vmem:[%s541 + $0x5c] sm:$0xf]
        %v1649 = vld [vmem:[%s541 + $0x60] sm:$0xf]
        %v1650 = vld [vmem:[%s541 + $0x64] sm:$0xf]
        %v1651 = vld [vmem:[%s541 + $0x68] sm:$0xf]
        %v1652 = vld [vmem:[%s541 + $0x6c] sm:$0xf]
        %v1653 = vld [vmem:[%s541 + $0x70] sm:$0xf]
        %v1654 = vld [vmem:[%s541 + $0x74] sm:$0xf]
        %v1655 = vld [vmem:[%s541 + $0x78] sm:$0xf]
        %v1656 = vld [vmem:[%s541 + $0x7c] sm:$0xf]
        %v1657 = vld [vmem:[%s541 + $0x80] sm:$0xf]
        %v1658 = vld [vmem:[%s541 + $0x84] sm:$0xf]
        %v1659 = vld [vmem:[%s541 + $0x88] sm:$0xf]
        %v1660 = vld [vmem:[%s541 + $0x8c] sm:$0xf]
        %v1661 = vld [vmem:[%s541 + $0x90] sm:$0xf]
        %v1662 = vld [vmem:[%s541 + $0x94] sm:$0xf]
        %v1663 = vld [vmem:[%s541 + $0x98] sm:$0xf]
        %v1664 = vld [vmem:[%s541 + $0x9c] sm:$0xf]
        %v1665 = vld [vmem:[%s541 + $0xa0] sm:$0xf]
        %v1666 = vld [vmem:[%s541 + $0xa4] sm:$0xf]
        %v1667 = vld [vmem:[%s541 + $0xa8] sm:$0xf]
        %v1668 = vld [vmem:[%s541 + $0xac] sm:$0xf]
        %v1669 = vld [vmem:[%s541 + $0xb0] sm:$0xf]
        %v1670 = vld [vmem:[%s541 + $0xb4] sm:$0xf]
        %v1671 = vld [vmem:[%s541 + $0xb8] sm:$0xf]
        %v1672 = vld [vmem:[%s541 + $0xbc] sm:$0xf]
        %v1673 = vld [vmem:[%s541 + $0xc0] sm:$0xf]
        %v1674 = vld [vmem:[%s541 + $0xc4] sm:$0xf]
        %v1675 = vld [vmem:[%s541 + $0xc8] sm:$0xf]
        %v1676 = vld [vmem:[%s541 + $0xcc] sm:$0xf]
        %v1677 = vld [vmem:[%s541 + $0xd0] sm:$0xf]
        %v1678 = vld [vmem:[%s541 + $0xd4] sm:$0xf]
        %v1679 = vld [vmem:[%s541 + $0xd8] sm:$0xf]
        %v1680 = vld [vmem:[%s541 + $0xdc] sm:$0xf]
        %v1681 = vld [vmem:[%s541 + $0xe0] sm:$0xf]
        %v1682 = vld [vmem:[%s541 + $0xe4] sm:$0xf]
        %v1683 = vld [vmem:[%s541 + $0xe8] sm:$0xf]
        %v1684 = vld [vmem:[%s541 + $0xec] sm:$0xf]
        %v1685 = vld [vmem:[%s541 + $0xf0] sm:$0xf]
        %v1686 = vld [vmem:[%s541 + $0xf4] sm:$0xf]
        %v1687 = vld [vmem:[%s541 + $0xf8] sm:$0xf]
        %v1688 = vld [vmem:[%s541 + $0xfc] sm:$0xf]
        %v1689 = vperm.slane %v1150, 3
        %v1754 = vunpack.c.l.b16 %v1625
        %v1755 = vunpack.c.l.b16 %v1626
        %v1756 = vunpack.c.l.b16 %v1627
        %v1757 = vunpack.c.l.b16 %v1628
        %v1758 = vunpack.c.l.b16 %v1629
        %v1759 = vunpack.c.l.b16 %v1630
        %v1760 = vunpack.c.l.b16 %v1631
        %v1761 = vunpack.c.l.b16 %v1632
        %v1762 = vunpack.c.l.b16 %v1633
        %v1763 = vunpack.c.l.b16 %v1634
        %v1764 = vunpack.c.l.b16 %v1635
        %v1765 = vunpack.c.l.b16 %v1636
        %v1766 = vunpack.c.l.b16 %v1637
        %v1767 = vunpack.c.l.b16 %v1638
        %v1768 = vunpack.c.l.b16 %v1639
        %v1769 = vunpack.c.l.b16 %v1640
        %v1770 = vunpack.c.l.b16 %v1641
        %v1771 = vunpack.c.l.b16 %v1642
        %v1772 = vunpack.c.l.b16 %v1643
        %v1773 = vunpack.c.l.b16 %v1644
        %v1774 = vunpack.c.l.b16 %v1645
        %v1775 = vunpack.c.l.b16 %v1646
        %v1776 = vunpack.c.l.b16 %v1647
        %v1777 = vunpack.c.l.b16 %v1648
        %v1778 = vunpack.c.l.b16 %v1649
        %v1779 = vunpack.c.l.b16 %v1650
        %v1780 = vunpack.c.l.b16 %v1651
        %v1781 = vunpack.c.l.b16 %v1652
        %v1782 = vunpack.c.l.b16 %v1653
        %v1783 = vunpack.c.l.b16 %v1654
        %v1784 = vunpack.c.l.b16 %v1655
        %v1785 = vunpack.c.l.b16 %v1656
        %v1786 = vunpack.c.l.b16 %v1657
        %v1787 = vunpack.c.l.b16 %v1658
        %v1788 = vunpack.c.l.b16 %v1659
        %v1789 = vunpack.c.l.b16 %v1660
        %v1790 = vunpack.c.l.b16 %v1661
        %v1791 = vunpack.c.l.b16 %v1662
        %v1792 = vunpack.c.l.b16 %v1663
        %v1793 = vunpack.c.l.b16 %v1664
        %v1794 = vunpack.c.l.b16 %v1665
        %v1795 = vunpack.c.l.b16 %v1666
        %v1796 = vunpack.c.l.b16 %v1667
        %v1797 = vunpack.c.l.b16 %v1668
        %v1798 = vunpack.c.l.b16 %v1669
        %v1799 = vunpack.c.l.b16 %v1670
        %v1800 = vunpack.c.l.b16 %v1671
        %v1801 = vunpack.c.l.b16 %v1672
        %v1802 = vunpack.c.l.b16 %v1673
        %v1803 = vunpack.c.l.b16 %v1674
        %v1804 = vunpack.c.l.b16 %v1675
        %v1805 = vunpack.c.l.b16 %v1676
        %v1806 = vunpack.c.l.b16 %v1677
        %v1807 = vunpack.c.l.b16 %v1678
        %v1808 = vunpack.c.l.b16 %v1679
        %v1809 = vunpack.c.l.b16 %v1680
        %v1810 = vunpack.c.l.b16 %v1681
        %v1811 = vunpack.c.l.b16 %v1682
        %v1812 = vunpack.c.l.b16 %v1683
        %v1813 = vunpack.c.l.b16 %v1684
        %v1814 = vunpack.c.l.b16 %v1685
        %v1815 = vunpack.c.l.b16 %v1686
        %v1816 = vunpack.c.l.b16 %v1687
        %v1817 = vunpack.c.l.b16 %v1688
        %v1818 = vpack.c.b16 %v1755, %v1754
        %v1819 = vpack.c.b16 %v1757, %v1756
        %v1820 = vpack.c.b16 %v1759, %v1758
        %v1821 = vpack.c.b16 %v1761, %v1760
        %v1822 = vpack.c.b16 %v1763, %v1762
        %v1823 = vpack.c.b16 %v1765, %v1764
        %v1824 = vpack.c.b16 %v1767, %v1766
        %v1825 = vpack.c.b16 %v1769, %v1768
        %v1826 = vpack.c.b16 %v1771, %v1770
        %v1827 = vpack.c.b16 %v1773, %v1772
        %v1828 = vpack.c.b16 %v1775, %v1774
        %v1829 = vpack.c.b16 %v1777, %v1776
        %v1830 = vpack.c.b16 %v1779, %v1778
        %v1831 = vpack.c.b16 %v1781, %v1780
        %v1832 = vpack.c.b16 %v1783, %v1782
        %v1833 = vpack.c.b16 %v1785, %v1784
        %v1834 = vpack.c.b16 %v1787, %v1786
        %v1835 = vpack.c.b16 %v1789, %v1788
        %v1836 = vpack.c.b16 %v1791, %v1790
        %v1837 = vpack.c.b16 %v1793, %v1792
        %v1838 = vpack.c.b16 %v1795, %v1794
        %v1839 = vpack.c.b16 %v1797, %v1796
        %v1840 = vpack.c.b16 %v1799, %v1798
        %v1841 = vpack.c.b16 %v1801, %v1800
        %v1842 = vpack.c.b16 %v1803, %v1802
        %v1843 = vpack.c.b16 %v1805, %v1804
        %v1844 = vpack.c.b16 %v1807, %v1806
        %v1845 = vpack.c.b16 %v1809, %v1808
        %v1846 = vpack.c.b16 %v1811, %v1810
        %v1847 = vpack.c.b16 %v1813, %v1812
        %v1848 = vpack.c.b16 %v1815, %v1814
        %v1849 = vpack.c.b16 %v1817, %v1816
        %1882 = vmatpush.bf16.msra.mxu0 %v1825
        %1883 = vmatpush.bf16.msra.mxu0 %v1824
        %1884 = vmatpush.bf16.msra.mxu0 %v1823
        %1885 = vmatpush.bf16.msra.mxu0 %v1822
        %1886 = vmatpush.bf16.msra.mxu0 %v1821
        %1887 = vmatpush.bf16.msra.mxu0 %v1820
        %1888 = vmatpush.bf16.msra.mxu0 %v1819
        %1889 = vmatpush.bf16.msra.mxu0 %v1818
        %1890 = vmatmul.bf16.gmra.mxu0 %v1621
        %v1891 = vpop.f32.mrf.mxu0
        %v1892 = vadd.f32 %v1689, %v1891
        %v1893 = vpop.f32.mrf.mxu0
        %1894 = vdwg.mxu0
        %1895 = vmatpush.bf16.msra.mxu0 %v1833
        %1896 = vmatpush.bf16.msra.mxu0 %v1832
        %1897 = vmatpush.bf16.msra.mxu0 %v1831
        %1898 = vmatpush.bf16.msra.mxu0 %v1830
        %1899 = vmatpush.bf16.msra.mxu0 %v1829
        %1900 = vmatpush.bf16.msra.mxu0 %v1828
        %1901 = vmatpush.bf16.msra.mxu0 %v1827
        %1902 = vmatpush.bf16.msra.mxu0 %v1826
        %1903 = vmatmul.bf16.gmra.mxu0 %v1622
        %v1904 = vpop.f32.mrf.mxu0
        %v1905 = vadd.f32 %v1892, %v1904
        %v1906 = vpop.f32.mrf.mxu0
        %1907 = vdwg.mxu0
        %1908 = vmatpush.bf16.msra.mxu0 %v1841
        %1909 = vmatpush.bf16.msra.mxu0 %v1840
        %1910 = vmatpush.bf16.msra.mxu0 %v1839
        %1911 = vmatpush.bf16.msra.mxu0 %v1838
        %1912 = vmatpush.bf16.msra.mxu0 %v1837
        %1913 = vmatpush.bf16.msra.mxu0 %v1836
        %1914 = vmatpush.bf16.msra.mxu0 %v1835
        %1915 = vmatpush.bf16.msra.mxu0 %v1834
        %1916 = vmatmul.bf16.gmra.mxu0 %v1623
        %v1917 = vpop.f32.mrf.mxu0
        %v1918 = vadd.f32 %v1905, %v1917
        %v1919 = vpop.f32.mrf.mxu0
        %1920 = vdwg.mxu0
        %1921 = vmatpush.bf16.msra.mxu0 %v1849
        %1922 = vmatpush.bf16.msra.mxu0 %v1848
        %1923 = vmatpush.bf16.msra.mxu0 %v1847
        %1924 = vmatpush.bf16.msra.mxu0 %v1846
        %1925 = vmatpush.bf16.msra.mxu0 %v1845
        %1926 = vmatpush.bf16.msra.mxu0 %v1844
        %1927 = vmatpush.bf16.msra.mxu0 %v1843
        %1928 = vmatpush.bf16.msra.mxu0 %v1842
        %1929 = vmatmul.bf16.gmra.mxu0 %v1624
        %v1930 = vpop.f32.mrf.mxu0
        %v1931 = vadd.f32 %v1918, %v1930
        %v1932 = vpop.f32.mrf.mxu0
        %1933 = vdwg.mxu0
        %v1934 = vadd.f32 %v1261, %v1931
        %1935 = vadd.xlane.f32.xlu0 %v1934
        %v1936 = vpop.xlane.xlu0 %1935
        %v1937 = vmul.f32 %v1936, %v1239
        %v1938 = vsub.f32 %v1934, %v1937
        %v1939 = vmul.f32 %v1938, %v1938
        %1940 = vadd.xlane.f32.xlu0 %v1939
        %v1941 = vpop.xlane.xlu0 %1940
        %v1942 = vmul.f32 %v1941, %v1239
        %v1943 = vadd.f32 %v1942, 1e-12
        %v1944 = vrsqrt.pop %v1943
        %v1945 = vmul.f32 %v1944, %v1943
        %v1946 = vmul.f32 %v1945, %v1944
        %v1947 = vmul.f32 0.5, %v1946
        %v1948 = vsub.f32 1.5, %v1947
        %v1949 = vmul.f32 %v1944, %v1948
        %vm1950 = vweird.f32 %v1943
        %vm1951 = vweird.f32 %v1944
        %vm1952 = vmor %vm1950, %vm1951
        %v1953 = vsel %vm1952, %v1944, %v1949
        %v1954 = vmul.f32 %v1938, %v1953
        %v1955 = vperm.slane %v1150, 4
        %v1956 = vmul.f32 %v1954, %v1955
        %v1957 = vperm.slane %v1150, 5
        %v1958 = vadd.f32 %v1956, %v1957
        %1959 = vst [vmem:[#allocation2] sm:$0xff] %v1958
        %p1960 = scmp.eq.s32.totalorder %s38, 1
        // Predicated region
        $region89: #{koelectra_multilabel_forward.1} parent=67 // pred_check
          %p1961 = pneg %p1960
        $region90: #{koelectra_multilabel_forward.1} parent=67 // pred_check_branch
          %1963 = sbr.rel (%p1961) target = $region92
        $region91: #{koelectra_multilabel_forward.1} parent=67 // pred_region
          %v1964 = vpack.c.bf16 %v1958, %v1958
          %v1965 = vld [vmem:[#allocation9] sm:$0xf]
          %v1966 = vld [vmem:[#allocation9 + $0x4] sm:$0xf]
          %v1967 = vld [vmem:[#allocation9 + $0x8] sm:$0xf]
          %v1968 = vld [vmem:[#allocation9 + $0xc] sm:$0xf]
          %v1969 = vld [vmem:[#allocation9 + $0x10] sm:$0xf]
          %v1970 = vld [vmem:[#allocation9 + $0x14] sm:$0xf]
          %v1971 = vld [vmem:[#allocation9 + $0x18] sm:$0xf]
          %v1972 = vld [vmem:[#allocation9 + $0x1c] sm:$0xf]
          %v1973 = vld [vmem:[#allocation9 + $0x20] sm:$0xf]
          %v1974 = vld [vmem:[#allocation9 + $0x24] sm:$0xf]
          %v1975 = vld [vmem:[#allocation9 + $0x28] sm:$0xf]
          %v1976 = vld [vmem:[#allocation9 + $0x2c] sm:$0xf]
          %v1977 = vld [vmem:[#allocation9 + $0x30] sm:$0xf]
          %v1978 = vld [vmem:[#allocation9 + $0x34] sm:$0xf]
          %v1979 = vld [vmem:[#allocation9 + $0x38] sm:$0xf]
          %v1980 = vld [vmem:[#allocation9 + $0x3c] sm:$0xf]
          %v1981 = vld [vmem:[%s11] sm:$0x1]
          %v1998 = vunpack.c.l.b16 %v1965
          %v1999 = vunpack.c.l.b16 %v1966
          %v2000 = vunpack.c.l.b16 %v1967
          %v2001 = vunpack.c.l.b16 %v1968
          %v2002 = vunpack.c.l.b16 %v1969
          %v2003 = vunpack.c.l.b16 %v1970
          %v2004 = vunpack.c.l.b16 %v1971
          %v2005 = vunpack.c.l.b16 %v1972
          %v2006 = vunpack.c.l.b16 %v1973
          %v2007 = vunpack.c.l.b16 %v1974
          %v2008 = vunpack.c.l.b16 %v1975
          %v2009 = vunpack.c.l.b16 %v1976
          %v2010 = vunpack.c.l.b16 %v1977
          %v2011 = vunpack.c.l.b16 %v1978
          %v2012 = vunpack.c.l.b16 %v1979
          %v2013 = vunpack.c.l.b16 %v1980
          %v2014 = vpack.c.b16 %v1999, %v1998
          %v2015 = vpack.c.b16 %v2001, %v2000
          %v2016 = vpack.c.b16 %v2003, %v2002
          %v2017 = vpack.c.b16 %v2005, %v2004
          %v2018 = vpack.c.b16 %v2007, %v2006
          %v2019 = vpack.c.b16 %v2009, %v2008
          %v2020 = vpack.c.b16 %v2011, %v2010
          %v2021 = vpack.c.b16 %v2013, %v2012
          %2030 = vmatpush.bf16.msra.mxu0 %v2021
          %2031 = vmatpush.bf16.msra.mxu0 %v2020
          %2032 = vmatpush.bf16.msra.mxu0 %v2019
          %2033 = vmatpush.bf16.msra.mxu0 %v2018
          %2034 = vmatpush.bf16.msra.mxu0 %v2017
          %2035 = vmatpush.bf16.msra.mxu0 %v2016
          %2036 = vmatpush.bf16.msra.mxu0 %v2015
          %2037 = vmatpush.bf16.msra.mxu0 %v2014
          %2038 = vmatmul.bf16.gmra.mxu0 %v1964
          %v2039 = vpop.f32.mrf.mxu0
          %v2040 = vadd.f32 %v1981, %v2039
          %v2041 = vpop.f32.mrf.mxu0
          %2042 = vdwg.mxu0
          %2043 = vst [vmem:[%s620] sm:$0x1] %v2040
        $region92: #{koelectra_multilabel_forward.1} parent=67 // pred_fallthru
          _
        %s2044 = sand.u32 %s350, 1
        %s2045 = scalar_lea.sflag [#allocation5], %s2044
        %s2046 = sand.u32 %s350, 1
        %s2047 = scalar_lea.vmem [#allocation11], %s2046
        // Predicated region
        $region93: #{koelectra_multilabel_forward.1} parent=67 // pred_check
          %p2048 = pneg %p360
        $region94: #{koelectra_multilabel_forward.1} parent=67 // pred_check_branch
          %2050 = sbr.rel (%p2048) target = $region96
        $region95: #{koelectra_multilabel_forward.1} parent=67 // pred_region
          %2052 = vsyncadd %s2045, 0
          %s2053 = scalar_lea.hbm %s12, %s37
          %s2055 = sshll.u32 %s2047, 4
          %s2056 = int_to_ptr.vmem [resolvable:$true] %s2055
          %s2057 = sshll.u32 %s2053, 4
          %s2058 = int_to_ptr.hbm [resolvable:$true] %s2057
          %2060 = dma.vmem_to_hbm [thread:$0]  %s2056, 16, %s2058, %s2045
        $region96: #{koelectra_multilabel_forward.1} parent=67 // pred_fallthru
          _
      $region68: #{koelectra_multilabel_forward.1} parent=5 // pred_fallthru
        _
      %p2061 = scmp.le.s32.totalorder 2, %s28
      // Predicated region
      $region97: #{koelectra_multilabel_forward.1} parent=5 // pred_check
        %p2062 = pneg %p2061
      $region98: #{koelectra_multilabel_forward.1} parent=5 // pred_check_branch
        %2064 = sbr.rel (%p2062) target = $region100
      $region99: #{koelectra_multilabel_forward.1} parent=5 // pred_region
        %s2065 = ssub.s32 %s28, 2
        // Predicated region
        $region101: #{koelectra_multilabel_forward.1} parent=99 // pred_check
          %p2066 = pneg %p366
        $region102: #{koelectra_multilabel_forward.1} parent=99 // pred_check_branch
          %2068 = sbr.rel (%p2066) target = $region104
        $region103: #{koelectra_multilabel_forward.1} parent=99 // pred_region
          %s2069 = sand.u32 %s351, 1
          %s2070 = scalar_lea.sflag [#allocation5], %s2069
          %s2071 = sand.u32 %s351, 1
          %s2072 = scalar_lea.vmem [#allocation11], %s2071
          %2074 = dma.done %s2070, 16
        $region104: #{koelectra_multilabel_forward.1} parent=99 // pred_fallthru
          _
      $region100: #{koelectra_multilabel_forward.1} parent=5 // pred_fallthru
        _
    $region6: #{koelectra_multilabel_forward.1} parent=1 // loop_footer
      %s32 = sadd.s32 1, %s28
    $region7: #{koelectra_multilabel_forward.1} parent=1 // loop_footer_branch
      %27 = sbr.rel target = $region3
    $region8: #{koelectra_multilabel_forward.1} parent=1 // loop_exit
      _
    %2075 = vsyncpa [#allocation4], 1
    %s2076 = scalar_lea.sflag [#allocation4], 1
    %2077 = vsyncpa %s2076, 1
    %2078 = vsyncpa [#allocation7], 1
    %s2079 = scalar_lea.sflag [#allocation7], 1
    %2080 = vsyncpa %s2079, 1
    %2081 = vsyncpa [#allocation10], 1
    %2082 = vsyncpa [#allocation5], 1
    %s2083 = scalar_lea.sflag [#allocation5], 1
    %2084 = vsyncpa %s2083, 1

</llo_original>
